<compile_context>
chip_gen: v7x
topology: tpu7x:2x2x1
jax: 0.10.0
libtpu: 0.0.40
codegen_flags: <defaults>
</compile_context>

<pallas_src>
import functools

import jax
import jax.numpy as jnp
from jax import lax
from jax.experimental import pallas as pl
from jax.experimental.pallas import tpu as pltpu


# Raised above the v5e default (16 MiB); safe on v6e/v7x. Sweep upward per chip
# when tiles grow (tile size / scoped VMEM is the dominant lever).
_VMEM_LIMIT_BYTES = 32 * 1024 * 1024


def _pick_row_tile(out_h: int) -> int:
    """Largest convenient divisor of Ho used as the output-row tile height."""
    for t in (8, 4, 2):
        if out_h % t == 0:
            return t
    return 1


def _dwsep_conv_kernel(x_ref, wdw_ref, wpw_ref, y_ref, stats_ref, xpad_ref, *,
                       stride, th, out_w, mxu_dtype):
    """Fused depthwise-3x3 + pointwise-1x1 conv for one (batch, row-tile) step.

    x_ref    : (1, H, W, Cin)        full (unpadded) image of batch element b
    wdw_ref  : (3, 3, Cin)           depthwise weights (f32, VPU)
    wpw_ref  : (Cin, Cout)           pointwise weights (mxu_dtype, MXU)
    y_ref    : (1, Cout, th*Wo)      conv output tile, NCHW-flattened, lane-dense
    stats_ref: (1, 1, Cout, 2)       per-tile BN partial stats [sum, sum_sq]
    xpad_ref : (H+2, W+2, Cin) VMEM  zero-padded image scratch (built at r == 0)
    """
    r = pl.program_id(1)
    h = x_ref.shape[1]
    w = x_ref.shape[2]
    cin = x_ref.shape[3]

    # Build the zero-padded image once per batch element and keep it resident
    # in VMEM across the row tiles (row axis is "arbitrary", so r runs in
    # order for each b).  This replaces a wrapper-side jnp.pad HBM copy.
    @pl.when(r == 0)
    def _():
        xpad_ref[...] = jnp.zeros_like(xpad_ref)
        xpad_ref[1:h + 1, 1:w + 1, :] = x_ref[0]

    # Padded-input row window needed for this tile of output rows.
    win = (th - 1) * stride + 3
    row0 = pl.multiple_of(r * (th * stride), th * stride)
    xwin = xpad_ref[pl.ds(row0, win), :, :].astype(jnp.float32)   # (win, Wp, Cin)

    wdw = wdw_ref[...].astype(jnp.float32)                        # (3, 3, Cin)

    # Depthwise conv: 9 shifted taps, per-channel scale on the VPU (f32
    # accumulation on all generations; v5e has no bf16 VALU).
    acc = jnp.zeros((th, out_w, cin), jnp.float32)
    for ky in range(3):
        for kx in range(3):
            if stride == 1:
                patch = xwin[ky:ky + th, kx:kx + out_w, :]
            else:
                patch = lax.slice(
                    xwin, (ky, kx, 0),
                    (ky + stride * (th - 1) + 1,
                     kx + stride * (out_w - 1) + 1,
                     cin),
                    (stride, stride, 1))
            acc = acc + patch * wdw[ky, kx]

    # Pointwise 1x1 conv == channel matmul on the MXU (f32 operands by
    # default for portability; f32 accumulation via preferred_element_type).
    a2 = acc.reshape(th * out_w, cin).astype(mxu_dtype)
    y = jnp.dot(a2, wpw_ref[...], preferred_element_type=jnp.float32)  # (th*Wo, Cout)

    # Transpose once so the stored tile is lane-dense and already in the
    # NCHW-flattened layout (folds the final transpose into this kernel).
    yt = y.T                                                           # (Cout, th*Wo)

    # BN partial statistics epilogue: per-channel sum and sum of squares of
    # this tile, so the statistics pass never re-reads the activation.
    stats_ref[0, 0, :, 0:1] = jnp.sum(yt, axis=1, keepdims=True)
    stats_ref[0, 0, :, 1:2] = jnp.sum(yt * yt, axis=1, keepdims=True)

    y_ref[0] = yt.astype(y_ref.dtype)


def _bn_relu_kernel(y_ref, scale_ref, shift_ref, o_ref):
    """Apply pre-folded BatchNorm (y*scale + shift) + ReLU on one tile.

    y_ref    : (1, Cout, th*Wo)   conv output tile (lane-dense)
    scale_ref: (Cout, 1)          gamma / sqrt(var + eps)
    shift_ref: (Cout, 1)          beta - mean * scale
    o_ref    : (1, Cout, th*Wo)
    """
    y = y_ref[0]
    o_ref[0] = jnp.maximum(y * scale_ref[...] + shift_ref[...], 0.0).astype(o_ref.dtype)


def depthwise_separable_conv(x_nchw, w_dw, w_pw, gamma, beta, *, stride,
                             eps=1e-5, mxu_dtype=jnp.float32):
    """Forward pass matching the PyTorch DepthwiseSeparableConv module.

    x_nchw: (N, Cin, H, W)       float32 (PyTorch NCHW)
    w_dw  : (Cin, 1, 3, 3)       depthwise Conv2d weight (groups=Cin, no bias)
    w_pw  : (Cout, Cin, 1, 1)    pointwise Conv2d weight (no bias)
    gamma, beta: (Cout,)         BatchNorm2d affine params
    Returns (N, Cout, Ho, Wo) in NCHW.

    mxu_dtype: operand dtype for the pointwise matmul.  f32 by default so the
    kernel runs everywhere (including interpret-mode sandboxes whose dot thunk
    rejects bf16 x bf16 = f32); set to jnp.bfloat16 on real v6e/v7x hardware.
    """
    n, cin, h, w = x_nchw.shape
    cout = w_pw.shape[0]
    ho = (h + 2 - 3) // stride + 1
    wo = (w + 2 - 3) // stride + 1
    th = _pick_row_tile(ho)
    r_tiles = ho // th

    # Layout glue only (no padded HBM copies, no trailing activation transpose):
    # NCHW -> NHWC for the depthwise (channels in lanes); weights re-laid out.
    x_nhwc = jnp.transpose(x_nchw, (0, 2, 3, 1))                       # (N,H,W,Cin)
    wdw = jnp.transpose(w_dw[:, 0], (1, 2, 0))                         # (3,3,Cin)
    wpw = jnp.transpose(w_pw[:, :, 0, 0], (1, 0)).astype(mxu_dtype)    # (Cin,Cout)

    conv_flat, stats = pl.pallas_call(
        functools.partial(_dwsep_conv_kernel, stride=stride, th=th, out_w=wo,
                          mxu_dtype=mxu_dtype),
        out_shape=(
            jax.ShapeDtypeStruct((n, cout, ho * wo), jnp.float32),
            jax.ShapeDtypeStruct((n, r_tiles, cout, 2), jnp.float32),
        ),
        grid_spec=pltpu.PrefetchScalarGridSpec(
            num_scalar_prefetch=0,
            grid=(n, r_tiles),
            in_specs=[
                # Full image per batch element; index map is constant in r so
                # the block stays resident across the row tiles of one b.
                pl.BlockSpec((1, h, w, cin), lambda b, r: (b, 0, 0, 0)),
                pl.BlockSpec((3, 3, cin), lambda b, r: (0, 0, 0)),
                pl.BlockSpec((cin, cout), lambda b, r: (0, 0)),
            ],
            out_specs=[
                pl.BlockSpec((1, cout, th * wo), lambda b, r: (b, 0, r)),
                pl.BlockSpec((1, 1, cout, 2), lambda b, r: (b, r, 0, 0)),
            ],
            scratch_shapes=[pltpu.VMEM((h + 2, w + 2, cin), x_nhwc.dtype)],
        ),
        compiler_params=pltpu.CompilerParams(
            dimension_semantics=("parallel", "arbitrary"),
            vmem_limit_bytes=_VMEM_LIMIT_BYTES),
    )(x_nhwc, wdw, wpw)

    # Finalize training-mode BatchNorm statistics (biased variance): a tiny
    # (Cout,)-sized reduction done by XLA; gamma is folded into the scale so
    # the apply kernel is a single fused multiply-add + ReLU.
    count = float(n * ho * wo)
    ssum = jnp.sum(stats[..., 0], axis=(0, 1))                         # (Cout,)
    ssq = jnp.sum(stats[..., 1], axis=(0, 1))                          # (Cout,)
    mean = ssum / count
    var = jnp.maximum(ssq / count - mean * mean, 0.0)                  # biased var
    inv = gamma.astype(jnp.float32) * lax.rsqrt(var + eps)
    scale = inv.reshape(cout, 1)
    shift = (beta.astype(jnp.float32) - mean * inv).reshape(cout, 1)

    out_flat = pl.pallas_call(
        _bn_relu_kernel,
        out_shape=jax.ShapeDtypeStruct((n, cout, ho * wo), jnp.float32),
        grid_spec=pltpu.PrefetchScalarGridSpec(
            num_scalar_prefetch=0,
            grid=(n, r_tiles),
            in_specs=[
                pl.BlockSpec((1, cout, th * wo), lambda b, r: (b, 0, r)),
                pl.BlockSpec((cout, 1), lambda b, r: (0, 0)),
                pl.BlockSpec((cout, 1), lambda b, r: (0, 0)),
            ],
            out_specs=pl.BlockSpec((1, cout, th * wo), lambda b, r: (b, 0, r)),
        ),
        compiler_params=pltpu.CompilerParams(
            dimension_semantics=("parallel", "parallel"),
            vmem_limit_bytes=_VMEM_LIMIT_BYTES),
    )(conv_flat, scale, shift)

    # (N, Cout, Ho*Wo) -> (N, Cout, Ho, Wo) is a free contiguous reshape; the
    # NCHW transpose was already folded into the conv kernel's store.
    return out_flat.reshape(n, cout, ho, wo)


def _reference(x_nchw, w_dw, w_pw, gamma, beta, *, stride, eps=1e-5):
    """Plain-JAX reference matching the PyTorch module (training-mode BN)."""
    cin = x_nchw.shape[1]
    dw = lax.conv_general_dilated(
        x_nchw, w_dw, (stride, stride), ((1, 1), (1, 1)),
        dimension_numbers=("NCHW", "OIHW", "NCHW"),
        feature_group_count=cin)
    pw = lax.conv_general_dilated(
        dw, w_pw, (1, 1), "VALID",
        dimension_numbers=("NCHW", "OIHW", "NCHW"))
    mean = jnp.mean(pw, axis=(0, 2, 3), keepdims=True)
    var = jnp.var(pw, axis=(0, 2, 3), keepdims=True)
    y = (pw - mean) / jnp.sqrt(var + eps) * gamma.reshape(1, -1, 1, 1) \
        + beta.reshape(1, -1, 1, 1)
    return jnp.maximum(y, 0.0)


if __name__ == "__main__":
    # Small, module-consistent shapes: batch=2, in_channels=4, out_channels=8,
    # spatial 16x16, stride=1.
    N, CIN, COUT, H, W, STRIDE = 2, 4, 8, 16, 16, 1

    key = jax.random.PRNGKey(0)
    kx, kdw, kpw, kg, kb = jax.random.split(key, 5)
    x = jax.random.normal(kx, (N, CIN, H, W), jnp.float32)
    w_dw = jax.random.normal(kdw, (CIN, 1, 3, 3), jnp.float32) * 0.2
    w_pw = jax.random.normal(kpw, (COUT, CIN, 1, 1), jnp.float32) * 0.2
    gamma = jnp.ones((COUT,), jnp.float32) + 0.1 * jax.random.normal(kg, (COUT,))
    beta = 0.1 * jax.random.normal(kb, (COUT,), jnp.float32)

    ref = _reference(x, w_dw, w_pw, gamma, beta, stride=STRIDE)

    # f32-operand MXU path (portable: also runs under interpret-mode sandboxes
    # whose dot thunk rejects bf16 x bf16 = f32). On real v6e/v7x hardware pass
    # mxu_dtype=jnp.bfloat16 for native MXU operand dtype.
    out = depthwise_separable_conv(x, w_dw, w_pw, gamma, beta, stride=STRIDE)
    out = jax.block_until_ready(out)
    assert out.shape == ref.shape, (out.shape, ref.shape)
    assert jnp.allclose(out, ref, atol=1e-4, rtol=1e-4), \
        float(jnp.max(jnp.abs(out - ref)))

    print("KERNEL_OK")
</pallas_src>

<mosaic_0001>
module attributes {stable_mosaic.version = 11 : i64} {
  func.func @_dwsep_conv_kernel(%arg0: i32, %arg1: i32, %arg2: memref<1x16x16x4xf32, #tpu.memory_space<vmem>>, %arg3: memref<3x3x4xf32, #tpu.memory_space<vmem>>, %arg4: memref<4x8xf32, #tpu.memory_space<vmem>>, %arg5: memref<1x8x128xf32, #tpu.memory_space<vmem>>, %arg6: memref<1x1x8x2xf32, #tpu.memory_space<vmem>>, %arg7: memref<18x18x4xf32, #tpu.memory_space<vmem>>) attributes {dimension_semantics = [#tpu.dimension_semantics<parallel>, #tpu.dimension_semantics<arbitrary>], iteration_bounds = array<i64: 2, 2>, scalar_prefetch = 0 : i64, scratch_operands = 1 : i64, tpu.core_type = #tpu.core_type<tc>, window_params = [{transform_indices = @transform_0, window_bounds = array<i64: 1, 16, 16, 4>}, {pipeline_mode = #tpu.pipeline_mode<synchronous>, transform_indices = @transform_1, window_bounds = array<i64: 3, 3, 4>}, {pipeline_mode = #tpu.pipeline_mode<synchronous>, transform_indices = @transform_2, window_bounds = array<i64: 4, 8>}, {transform_indices = @transform_3, window_bounds = array<i64: 1, 8, 128>}, {transform_indices = @transform_4, window_bounds = array<i64: 1, 1, 8, 2>}]} {
    %c0_i32 = arith.constant 0 : i32
    %0 = arith.cmpi eq, %arg1, %c0_i32 : i32
    %1 = arith.extui %0 : i1 to i32
    %c0_i32_0 = arith.constant 0 : i32
    %2 = arith.cmpi ne, %1, %c0_i32_0 : i32
    scf.if %2 {
      %cst_20 = arith.constant 0.000000e+00 : f32
      %90 = vector.broadcast %cst_20 : f32 to vector<18x18x4xf32>
      %c0_21 = arith.constant 0 : index
      %c0_22 = arith.constant 0 : index
      %c0_23 = arith.constant 0 : index
      %91 = vector.load %arg7[%c0_21, %c0_22, %c0_23] : memref<18x18x4xf32, #tpu.memory_space<vmem>>, vector<18x18x4xf32>
      tpu.vector_store %arg7[%c0_21, %c0_22, %c0_23], %90 {strides = array<i32>} : memref<18x18x4xf32, #tpu.memory_space<vmem>>, vector<18x18x4xf32>,
      %c0_24 = arith.constant 0 : index
      %c0_25 = arith.constant 0 : index
      %c0_26 = arith.constant 0 : index
      %c0_27 = arith.constant 0 : index
      %92 = vector.load %arg2[%c0_24, %c0_25, %c0_26, %c0_27] : memref<1x16x16x4xf32, #tpu.memory_space<vmem>>, vector<1x16x16x4xf32>
      %93 = vector.shape_cast %92 : vector<1x16x16x4xf32> to vector<16x16x4xf32>
      %c1_28 = arith.constant 1 : index
      %c1_29 = arith.constant 1 : index
      %c0_30 = arith.constant 0 : index
      %94 = vector.load %arg7[%c1_28, %c1_29, %c0_30] : memref<18x18x4xf32, #tpu.memory_space<vmem>>, vector<16x16x4xf32>
      tpu.vector_store %arg7[%c1_28, %c1_29, %c0_30], %93 {strides = array<i32>} : memref<18x18x4xf32, #tpu.memory_space<vmem>>, vector<16x16x4xf32>,
    } else {
    }
    %c8_i32 = arith.constant 8 : i32
    %3 = arith.muli %arg1, %c8_i32 : i32
    %4 = tpu.assume_multiple %3, 8 : i32
    %5 = arith.index_cast %4 : i32 to index
    %c0 = arith.constant 0 : index
    %c0_1 = arith.constant 0 : index
    %6 = vector.load %arg7[%5, %c0, %c0_1] : memref<18x18x4xf32, #tpu.memory_space<vmem>>, vector<10x18x4xf32>
    %c0_2 = arith.constant 0 : index
    %c0_3 = arith.constant 0 : index
    %c0_4 = arith.constant 0 : index
    %7 = vector.load %arg3[%c0_2, %c0_3, %c0_4] : memref<3x3x4xf32, #tpu.memory_space<vmem>>, vector<3x3x4xf32>
    %cst = arith.constant 0.000000e+00 : f32
    %8 = vector.broadcast %cst : f32 to vector<8x16x4xf32>
    %9 = vector.extract_strided_slice %6 {offsets = [0, 0, 0], sizes = [8, 16, 4], strides = [1, 1, 1]} : vector<10x18x4xf32> to vector<8x16x4xf32>
    %10 = vector.extract_strided_slice %7 {offsets = [0, 0, 0], sizes = [1, 1, 4], strides = [1, 1, 1]} : vector<3x3x4xf32> to vector<1x1x4xf32>
    %11 = vector.shape_cast %10 : vector<1x1x4xf32> to vector<4xf32>
    %12 = vector.shape_cast %11 : vector<4xf32> to vector<1x1x4xf32>
    %13 = vector.broadcast %12 : vector<1x1x4xf32> to vector<8x16x4xf32>
    %14 = arith.mulf %9, %13 : vector<8x16x4xf32>
    %15 = arith.addf %8, %14 : vector<8x16x4xf32>
    %16 = vector.extract_strided_slice %6 {offsets = [0, 1, 0], sizes = [8, 16, 4], strides = [1, 1, 1]} : vector<10x18x4xf32> to vector<8x16x4xf32>
    %17 = vector.extract_strided_slice %7 {offsets = [0, 1, 0], sizes = [1, 1, 4], strides = [1, 1, 1]} : vector<3x3x4xf32> to vector<1x1x4xf32>
    %18 = vector.shape_cast %17 : vector<1x1x4xf32> to vector<4xf32>
    %19 = vector.shape_cast %18 : vector<4xf32> to vector<1x1x4xf32>
    %20 = vector.broadcast %19 : vector<1x1x4xf32> to vector<8x16x4xf32>
    %21 = arith.mulf %16, %20 : vector<8x16x4xf32>
    %22 = arith.addf %15, %21 : vector<8x16x4xf32>
    %23 = vector.extract_strided_slice %6 {offsets = [0, 2, 0], sizes = [8, 16, 4], strides = [1, 1, 1]} : vector<10x18x4xf32> to vector<8x16x4xf32>
    %24 = vector.extract_strided_slice %7 {offsets = [0, 2, 0], sizes = [1, 1, 4], strides = [1, 1, 1]} : vector<3x3x4xf32> to vector<1x1x4xf32>
    %25 = vector.shape_cast %24 : vector<1x1x4xf32> to vector<4xf32>
    %26 = vector.shape_cast %25 : vector<4xf32> to vector<1x1x4xf32>
    %27 = vector.broadcast %26 : vector<1x1x4xf32> to vector<8x16x4xf32>
    %28 = arith.mulf %23, %27 : vector<8x16x4xf32>
    %29 = arith.addf %22, %28 : vector<8x16x4xf32>
    %30 = vector.extract_strided_slice %6 {offsets = [1, 0, 0], sizes = [8, 16, 4], strides = [1, 1, 1]} : vector<10x18x4xf32> to vector<8x16x4xf32>
    %31 = vector.extract_strided_slice %7 {offsets = [1, 0, 0], sizes = [1, 1, 4], strides = [1, 1, 1]} : vector<3x3x4xf32> to vector<1x1x4xf32>
    %32 = vector.shape_cast %31 : vector<1x1x4xf32> to vector<4xf32>
    %33 = vector.shape_cast %32 : vector<4xf32> to vector<1x1x4xf32>
    %34 = vector.broadcast %33 : vector<1x1x4xf32> to vector<8x16x4xf32>
    %35 = arith.mulf %30, %34 : vector<8x16x4xf32>
    %36 = arith.addf %29, %35 : vector<8x16x4xf32>
    %37 = vector.extract_strided_slice %6 {offsets = [1, 1, 0], sizes = [8, 16, 4], strides = [1, 1, 1]} : vector<10x18x4xf32> to vector<8x16x4xf32>
    %38 = vector.extract_strided_slice %7 {offsets = [1, 1, 0], sizes = [1, 1, 4], strides = [1, 1, 1]} : vector<3x3x4xf32> to vector<1x1x4xf32>
    %39 = vector.shape_cast %38 : vector<1x1x4xf32> to vector<4xf32>
    %40 = vector.shape_cast %39 : vector<4xf32> to vector<1x1x4xf32>
    %41 = vector.broadcast %40 : vector<1x1x4xf32> to vector<8x16x4xf32>
    %42 = arith.mulf %37, %41 : vector<8x16x4xf32>
    %43 = arith.addf %36, %42 : vector<8x16x4xf32>
    %44 = vector.extract_strided_slice %6 {offsets = [1, 2, 0], sizes = [8, 16, 4], strides = [1, 1, 1]} : vector<10x18x4xf32> to vector<8x16x4xf32>
    %45 = vector.extract_strided_slice %7 {offsets = [1, 2, 0], sizes = [1, 1, 4], strides = [1, 1, 1]} : vector<3x3x4xf32> to vector<1x1x4xf32>
    %46 = vector.shape_cast %45 : vector<1x1x4xf32> to vector<4xf32>
    %47 = vector.shape_cast %46 : vector<4xf32> to vector<1x1x4xf32>
    %48 = vector.broadcast %47 : vector<1x1x4xf32> to vector<8x16x4xf32>
    %49 = arith.mulf %44, %48 : vector<8x16x4xf32>
    %50 = arith.addf %43, %49 : vector<8x16x4xf32>
    %51 = vector.extract_strided_slice %6 {offsets = [2, 0, 0], sizes = [8, 16, 4], strides = [1, 1, 1]} : vector<10x18x4xf32> to vector<8x16x4xf32>
    %52 = vector.extract_strided_slice %7 {offsets = [2, 0, 0], sizes = [1, 1, 4], strides = [1, 1, 1]} : vector<3x3x4xf32> to vector<1x1x4xf32>
    %53 = vector.shape_cast %52 : vector<1x1x4xf32> to vector<4xf32>
    %54 = vector.shape_cast %53 : vector<4xf32> to vector<1x1x4xf32>
    %55 = vector.broadcast %54 : vector<1x1x4xf32> to vector<8x16x4xf32>
    %56 = arith.mulf %51, %55 : vector<8x16x4xf32>
    %57 = arith.addf %50, %56 : vector<8x16x4xf32>
    %58 = vector.extract_strided_slice %6 {offsets = [2, 1, 0], sizes = [8, 16, 4], strides = [1, 1, 1]} : vector<10x18x4xf32> to vector<8x16x4xf32>
    %59 = vector.extract_strided_slice %7 {offsets = [2, 1, 0], sizes = [1, 1, 4], strides = [1, 1, 1]} : vector<3x3x4xf32> to vector<1x1x4xf32>
    %60 = vector.shape_cast %59 : vector<1x1x4xf32> to vector<4xf32>
    %61 = vector.shape_cast %60 : vector<4xf32> to vector<1x1x4xf32>
    %62 = vector.broadcast %61 : vector<1x1x4xf32> to vector<8x16x4xf32>
    %63 = arith.mulf %58, %62 : vector<8x16x4xf32>
    %64 = arith.addf %57, %63 : vector<8x16x4xf32>
    %65 = vector.extract_strided_slice %6 {offsets = [2, 2, 0], sizes = [8, 16, 4], strides = [1, 1, 1]} : vector<10x18x4xf32> to vector<8x16x4xf32>
    %66 = vector.extract_strided_slice %7 {offsets = [2, 2, 0], sizes = [1, 1, 4], strides = [1, 1, 1]} : vector<3x3x4xf32> to vector<1x1x4xf32>
    %67 = vector.shape_cast %66 : vector<1x1x4xf32> to vector<4xf32>
    %68 = vector.shape_cast %67 : vector<4xf32> to vector<1x1x4xf32>
    %69 = vector.broadcast %68 : vector<1x1x4xf32> to vector<8x16x4xf32>
    %70 = arith.mulf %65, %69 : vector<8x16x4xf32>
    %71 = arith.addf %64, %70 : vector<8x16x4xf32>
    %72 = vector.shape_cast %71 : vector<8x16x4xf32> to vector<128x4xf32>
    %c0_5 = arith.constant 0 : index
    %c0_6 = arith.constant 0 : index
    %73 = vector.load %arg4[%c0_5, %c0_6] : memref<4x8xf32, #tpu.memory_space<vmem>>, vector<4x8xf32>
    %cst_7 = arith.constant dense<0.000000e+00> : vector<128x8xf32>
    %74 = tpu.matmul %72, %73, %cst_7 {dimension_numbers = #tpu.dot_dimension_numbers<[1], [0], [0], [1], [0, 0, 1, 1], [], []>} : vector<128x4xf32>, vector<4x8xf32>, vector<128x8xf32> -> vector<128x8xf32>
    %75 = tpu.transpose %74, [1, 0] : vector<128x8xf32> -> vector<8x128xf32>
    %cst_8 = arith.constant dense<0.000000e+00> : vector<8xf32>
    %76 = vector.multi_reduction <add>, %75, %cst_8 [1] : vector<8x128xf32> to vector<8xf32>
    %77 = vector.shape_cast %76 : vector<8xf32> to vector<8x1xf32>
    %c0_9 = arith.constant 0 : index
    %c0_10 = arith.constant 0 : index
    %c0_11 = arith.constant 0 : index
    %c0_12 = arith.constant 0 : index
    %78 = vector.load %arg6[%c0_9, %c0_10, %c0_11, %c0_12] : memref<1x1x8x2xf32, #tpu.memory_space<vmem>>, vector<1x1x8x1xf32>
    %79 = vector.shape_cast %78 : vector<1x1x8x1xf32> to vector<8x1xf32>
    %80 = vector.shape_cast %77 : vector<8x1xf32> to vector<1x1x8x1xf32>
    tpu.vector_store %arg6[%c0_9, %c0_10, %c0_11, %c0_12], %80 {strides = array<i32>} : memref<1x1x8x2xf32, #tpu.memory_space<vmem>>, vector<1x1x8x1xf32>,
    %81 = arith.mulf %75, %75 : vector<8x128xf32>
    %cst_13 = arith.constant dense<0.000000e+00> : vector<8xf32>
    %82 = vector.multi_reduction <add>, %81, %cst_13 [1] : vector<8x128xf32> to vector<8xf32>
    %83 = vector.shape_cast %82 : vector<8xf32> to vector<8x1xf32>
    %c0_14 = arith.constant 0 : index
    %c0_15 = arith.constant 0 : index
    %c0_16 = arith.constant 0 : index
    %c1 = arith.constant 1 : index
    %84 = vector.load %arg6[%c0_14, %c0_15, %c0_16, %c1] : memref<1x1x8x2xf32, #tpu.memory_space<vmem>>, vector<1x1x8x1xf32>
    %85 = vector.shape_cast %84 : vector<1x1x8x1xf32> to vector<8x1xf32>
    %86 = vector.shape_cast %83 : vector<8x1xf32> to vector<1x1x8x1xf32>
    tpu.vector_store %arg6[%c0_14, %c0_15, %c0_16, %c1], %86 {strides = array<i32>} : memref<1x1x8x2xf32, #tpu.memory_space<vmem>>, vector<1x1x8x1xf32>,
    %c0_17 = arith.constant 0 : index
    %c0_18 = arith.constant 0 : index
    %c0_19 = arith.constant 0 : index
    %87 = vector.load %arg5[%c0_17, %c0_18, %c0_19] : memref<1x8x128xf32, #tpu.memory_space<vmem>>, vector<1x8x128xf32>
    %88 = vector.shape_cast %87 : vector<1x8x128xf32> to vector<8x128xf32>
    %89 = vector.shape_cast %75 : vector<8x128xf32> to vector<1x8x128xf32>
    tpu.vector_store %arg5[%c0_17, %c0_18, %c0_19], %89 {strides = array<i32>} : memref<1x8x128xf32, #tpu.memory_space<vmem>>, vector<1x8x128xf32>,
    return
  }
  func.func @transform_0(%arg0: i32, %arg1: i32) -> (i32, i32, i32, i32) {
    %c0_i32 = arith.constant 0 : i32
    %c0_i32_0 = arith.constant 0 : i32
    %c0_i32_1 = arith.constant 0 : i32
    %c0_i32_2 = arith.constant 0 : i32
    return %arg0, %c0_i32, %c0_i32_0, %c0_i32_1 : i32, i32, i32, i32
  }
  func.func @transform_1(%arg0: i32, %arg1: i32) -> (i32, i32, i32) {
    %c0_i32 = arith.constant 0 : i32
    %c0_i32_0 = arith.constant 0 : i32
    %c0_i32_1 = arith.constant 0 : i32
    %c0_i32_2 = arith.constant 0 : i32
    return %c0_i32, %c0_i32_0, %c0_i32_1 : i32, i32, i32
  }
  func.func @transform_2(%arg0: i32, %arg1: i32) -> (i32, i32) {
    %c0_i32 = arith.constant 0 : i32
    %c0_i32_0 = arith.constant 0 : i32
    %c0_i32_1 = arith.constant 0 : i32
    return %c0_i32, %c0_i32_0 : i32, i32
  }
  func.func @transform_3(%arg0: i32, %arg1: i32) -> (i32, i32, i32) {
    %c0_i32 = arith.constant 0 : i32
    %c0_i32_0 = arith.constant 0 : i32
    return %arg0, %c0_i32, %arg1 : i32, i32, i32
  }
  func.func @transform_4(%arg0: i32, %arg1: i32) -> (i32, i32, i32, i32) {
    %c0_i32 = arith.constant 0 : i32
    %c0_i32_0 = arith.constant 0 : i32
    %c0_i32_1 = arith.constant 0 : i32
    return %arg0, %arg1, %c0_i32, %c0_i32_0 : i32, i32, i32, i32
  }
}

</mosaic_0001>

<llo_original>
// kernel: tpu_custom_call.1
$region0: #{tpu_custom_call.1}
  #allocation0 [shape = 'u32[]', space=smem, size = 0x4, offset = 0x4, fixed_abs, tag = 'smem constant byte address 0x4 - core index']
  #allocation1 [shape = 'u32[144,128]{1,0:T(1,128)}', space=vmem, size = 0x12000, scoped, tag = 'internal scratch']
  #allocation2 [shape = 'f32[18,18,4]{2,1,0:T(8,128)}', space=vmem, size = 0x36000, scoped, tag = 'scratch operand']
  %s0 = inlined_call_operand.vmem [shape: f32[2,16,16,4], index: 0, kind: input, shape index: {}]
  %s1 = inlined_call_operand.vmem [shape: f32[3,3,4], index: 1, kind: input, shape index: {}]
  %s2 = inlined_call_operand.vmem [shape: f32[4,8], index: 2, kind: input, shape index: {}]
  %s3 = inlined_call_operand.hbm [shape: f32[2,8,256], index: 3, kind: output, shape index: {0}]
  %s4 = inlined_call_operand.vmem [shape: f32[2,2,8,2], index: 4, kind: output, shape index: {1}]
  %5 = xla_tuple %s3, %s4
  %s6 = sld [smem:[#allocation0]]
  $region57: #{tpu_custom_call.1} parent=0
    _
  %s8 = ssub.s32 1, %s6
  %s9 = scalar_select 0, %s8, %s6
  $region1: #{tpu_custom_call.1} parent=0
    #allocation3 [shape = 'u8[8192]{0}', space=vmem, size = 0x2000, scoped, tag = 'output window, operand 0']
    #allocation4 [shape = 's32[2]{0}', space=sflag, size = 0x8, scoped, tag = 'scoped memory for tpu_custom_call.1']
    %10 = vsyncpa [#allocation4], 0
    %s11 = scalar_lea.sflag [#allocation4], 1
    %12 = vsyncpa %s11, 0
    loop: start=0, step=1, limit=6
    $region2: #{tpu_custom_call.1} parent=1 // loop_pre_header
      _
    $region3: #{tpu_custom_call.1} parent=1 // loop_header
      %s14 = sphi 0, %s18
      %p15 = scmp.ge.s32.totalorder %s14, 6
      %s21 = sphi 0, %s33
      %s22 = sphi 0, %s29
      %s23 = sphi 0, %s21
      %s24 = sphi 0, %s22
      %s25 = sphi 0, %s23
      %s26 = sphi 0, %s24
      %s36 = sphi 0, %s38
      %s39 = sphi 0, %s36
      %s40 = sphi 0, %s39
      %s56 = sphi 0, %s40
      %s60 = sphi 0, %s60
      %s62 = sphi 0, %s60
      %s63 = sphi 0, %s62
      %s77 = sphi 0, %s63
      %s81 = sphi 0, %s81
      %s83 = sphi 0, %s81
      %s84 = sphi 0, %s83
      %s98 = sphi 0, %s84
      %s106 = sphi 0, %s108
      %s109 = sphi 0, %s106
      %s110 = sphi 0, %s109
      %s126 = sphi 0, %s110
      %s134 = sphi 0, %s136
      %s137 = sphi 0, %s134
      %s138 = sphi 0, %s137
      %s154 = sphi 0, %s138
    $region4: #{tpu_custom_call.1} parent=1 // loop_header_branch
      %17 = sbr.rel (%p15) target = $region8
    $region5: #{tpu_custom_call.1} parent=1 // loop_body
      %s19 = ssub.s32 %s14, 1
      %s20 = ssub.s32 %s14, 2
      %s27 = sadd.s32 1, %s22
      %p28 = scmp.ge.s32.totalorder %s27, 2
      %s29 = scalar_select %p28, 0, %s27
      %s30 = sadd.s32 1, %s21
      %s31 = scalar_select %p28, %s30, %s21
      %p32 = scmp.ge.s32.totalorder %s31, 2
      %s33 = scalar_select %p32, 0, %s31
      %s34 = ssub.s32 %s21, %s33
      %p35 = scmp.eq.s32.totalorder %s34, 0
      %s37 = sadd.s32 %s36, 1
      %s38 = scalar_select %p35, %s36, %s37
      %p41 = pneg %p35
      %p42 = scmp.eq.s32.totalorder %s14, 3
      %p43 = por %p41, %p42
      %p44 = scmp.ne.s32.totalorder %s36, %s39
      %p45 = scmp.eq.s32.totalorder %s14, 0
      %p46 = por %p44, %p45
      %p47 = scmp.ne.s32.totalorder %s36, %s39
      %p48 = scmp.eq.s32.totalorder %s19, 3
      %p49 = por %p47, %p48
      %p50 = scmp.ne.s32.totalorder %s39, %s40
      %p51 = scmp.eq.s32.totalorder %s19, 0
      %p52 = por %p50, %p51
      %p53 = scmp.ne.s32.totalorder %s39, %s40
      %p54 = scmp.eq.s32.totalorder %s20, 3
      %p55 = por %p53, %p54
      %p57 = scmp.ne.s32.totalorder %s40, %s56
      %p58 = scmp.eq.s32.totalorder %s20, 0
      %p59 = por %p57, %p58
      %s61 = sadd.s32 %s60, 1
      %p64 = scmp.eq.s32.totalorder %s14, 3
      %p65 = scmp.ne.s32.totalorder %s60, %s62
      %p66 = scmp.eq.s32.totalorder %s14, 0
      %p67 = por %p65, %p66
      %p68 = scmp.ne.s32.totalorder %s60, %s62
      %p69 = scmp.eq.s32.totalorder %s19, 3
      %p70 = por %p68, %p69
      %p71 = scmp.ne.s32.totalorder %s62, %s63
      %p72 = scmp.eq.s32.totalorder %s19, 0
      %p73 = por %p71, %p72
      %p74 = scmp.ne.s32.totalorder %s62, %s63
      %p75 = scmp.eq.s32.totalorder %s20, 3
      %p76 = por %p74, %p75
      %p78 = scmp.ne.s32.totalorder %s63, %s77
      %p79 = scmp.eq.s32.totalorder %s20, 0
      %p80 = por %p78, %p79
      %s82 = sadd.s32 %s81, 1
      %p85 = scmp.eq.s32.totalorder %s14, 3
      %p86 = scmp.ne.s32.totalorder %s81, %s83
      %p87 = scmp.eq.s32.totalorder %s14, 0
      %p88 = por %p86, %p87
      %p89 = scmp.ne.s32.totalorder %s81, %s83
      %p90 = scmp.eq.s32.totalorder %s19, 3
      %p91 = por %p89, %p90
      %p92 = scmp.ne.s32.totalorder %s83, %s84
      %p93 = scmp.eq.s32.totalorder %s19, 0
      %p94 = por %p92, %p93
      %p95 = scmp.ne.s32.totalorder %s83, %s84
      %p96 = scmp.eq.s32.totalorder %s20, 3
      %p97 = por %p95, %p96
      %p99 = scmp.ne.s32.totalorder %s84, %s98
      %p100 = scmp.eq.s32.totalorder %s20, 0
      %p101 = por %p99, %p100
      %s102 = ssub.s32 %s21, %s33
      %s103 = ssub.s32 %s22, %s29
      %s104 = sor.u32 %s102, %s103
      %p105 = scmp.eq.s32.totalorder %s104, 0
      %s107 = sadd.s32 %s106, 1
      %s108 = scalar_select %p105, %s106, %s107
      %p111 = pneg %p105
      %p112 = scmp.eq.s32.totalorder %s14, 3
      %p113 = por %p111, %p112
      %p114 = scmp.ne.s32.totalorder %s106, %s109
      %p115 = scmp.eq.s32.totalorder %s14, 0
      %p116 = por %p114, %p115
      %p117 = scmp.ne.s32.totalorder %s106, %s109
      %p118 = scmp.eq.s32.totalorder %s19, 3
      %p119 = por %p117, %p118
      %p120 = scmp.ne.s32.totalorder %s109, %s110
      %p121 = scmp.eq.s32.totalorder %s19, 0
      %p122 = por %p120, %p121
      %p123 = scmp.ne.s32.totalorder %s109, %s110
      %p124 = scmp.eq.s32.totalorder %s20, 3
      %p125 = por %p123, %p124
      %p127 = scmp.ne.s32.totalorder %s110, %s126
      %p128 = scmp.eq.s32.totalorder %s20, 0
      %p129 = por %p127, %p128
      %s130 = ssub.s32 %s21, %s33
      %s131 = ssub.s32 %s22, %s29
      %s132 = sor.u32 %s130, %s131
      %p133 = scmp.eq.s32.totalorder %s132, 0
      %s135 = sadd.s32 %s134, 1
      %s136 = scalar_select %p133, %s134, %s135
      %p139 = pneg %p133
      %p140 = scmp.eq.s32.totalorder %s14, 3
      %p141 = por %p139, %p140
      %p142 = scmp.ne.s32.totalorder %s134, %s137
      %p143 = scmp.eq.s32.totalorder %s14, 0
      %p144 = por %p142, %p143
      %p145 = scmp.ne.s32.totalorder %s134, %s137
      %p146 = scmp.eq.s32.totalorder %s19, 3
      %p147 = por %p145, %p146
      %p148 = scmp.ne.s32.totalorder %s137, %s138
      %p149 = scmp.eq.s32.totalorder %s19, 0
      %p150 = por %p148, %p149
      %p151 = scmp.ne.s32.totalorder %s137, %s138
      %p152 = scmp.eq.s32.totalorder %s20, 3
      %p153 = por %p151, %p152
      %p155 = scmp.ne.s32.totalorder %s138, %s154
      %p156 = scmp.eq.s32.totalorder %s20, 0
      %p157 = por %p155, %p156
      %p158 = scmp.le.s32.totalorder 1, %s14
      %p159 = scmp.lt.s32.totalorder %s14, 5
      %p160 = pnand %p158, %p159
      %p161 = pneg %p160
      // Predicated region
      $region9: #{tpu_custom_call.1} parent=5 // pred_check
        _
      $region10: #{tpu_custom_call.1} parent=5 // pred_check_branch
        %163 = sbr.rel (%p160) target = $region12
      $region11: #{tpu_custom_call.1} parent=5 // pred_region
        %s164 = ssub.s32 %s14, 1
        // Predicated region
        $region13: #{tpu_custom_call.1} parent=11 // pred_check
          %p165 = pneg %p73
        $region14: #{tpu_custom_call.1} parent=11 // pred_check_branch
          %167 = sbr.rel (%p165) target = $region16
        $region15: #{tpu_custom_call.1} parent=11 // pred_region
          _
        $region16: #{tpu_custom_call.1} parent=11 // pred_fallthru
          _
        // Predicated region
        $region17: #{tpu_custom_call.1} parent=11 // pred_check
          %p168 = pneg %p94
        $region18: #{tpu_custom_call.1} parent=11 // pred_check_branch
          %170 = sbr.rel (%p168) target = $region20
        $region19: #{tpu_custom_call.1} parent=11 // pred_region
          _
        $region20: #{tpu_custom_call.1} parent=11 // pred_fallthru
          _
      $region12: #{tpu_custom_call.1} parent=5 // pred_fallthru
        _
      %p171 = scmp.lt.s32.totalorder %s14, 4
      // Predicated region
      $region21: #{tpu_custom_call.1} parent=5 // pred_check
        %p172 = pneg %p171
      $region22: #{tpu_custom_call.1} parent=5 // pred_check_branch
        %174 = sbr.rel (%p172) target = $region24
      $region23: #{tpu_custom_call.1} parent=5 // pred_region
        // Predicated region
        $region25: #{tpu_custom_call.1} parent=23 // pred_check
          %p175 = pneg %p46
        $region26: #{tpu_custom_call.1} parent=23 // pred_check_branch
          %177 = sbr.rel (%p175) target = $region28
        $region27: #{tpu_custom_call.1} parent=23 // pred_region
          %p178 = scmp.lt.s32.totalorder %s21, 1
          %s179 = scalar_select %p178, %s21, 1
          %s180 = smul.addr %s179, 32
          %s181 = smul.addr %s180, 8
          %s182 = scalar_lea.vmem %s0, %s181
        $region28: #{tpu_custom_call.1} parent=23 // pred_fallthru
          _
      $region24: #{tpu_custom_call.1} parent=5 // pred_fallthru
        _
      %p183 = scmp.le.s32.totalorder 1, %s14
      %p184 = scmp.lt.s32.totalorder %s14, 5
      %p185 = pnand %p183, %p184
      %p186 = pneg %p185
      // Predicated region
      $region29: #{tpu_custom_call.1} parent=5 // pred_check
        _
      $region30: #{tpu_custom_call.1} parent=5 // pred_check_branch
        %188 = sbr.rel (%p185) target = $region32
      $region31: #{tpu_custom_call.1} parent=5 // pred_region
        %s189 = ssub.s32 %s14, 1
        %p190 = scmp.lt.s32.totalorder %s23, 1
        %s191 = scalar_select %p190, %s23, 1
        %s192 = smul.addr %s191, 32
        %s193 = smul.addr %s192, 8
        %s194 = scalar_lea.vmem %s0, %s193
        %p195 = pneg %p52
        %p196 = pneg %p49
        %p197 = pneg %p73
        %p198 = pneg %p70
        %p199 = pneg %p94
        %p200 = pneg %p91
        %p201 = pneg %p122
        %p202 = pneg %p119
        %s203 = sand.u32 %s109, 1
        %s204 = scalar_lea.sflag [#allocation4], %s203
        %s205 = sand.u32 %s109, 1
        %s206 = smul.addr %s205, 8
        %s207 = scalar_lea.vmem [#allocation3], %s206
        %p208 = pneg %p150
        %p209 = pneg %p147
        %p210 = scmp.lt.s32.totalorder %s23, 1
        %s211 = scalar_select %p210, %s23, 1
        %p212 = scmp.lt.s32.totalorder %s24, 1
        %s213 = scalar_select %p212, %s24, 1
        %s214 = smul.addr %s211, 2
        %s215 = sadd.s32 %s213, %s214
        %s216 = smul.addr %s215, 8
        %s217 = scalar_lea.vmem %s4, %s216
        %p218 = scmp.lt.s32.totalorder %s23, 1
        %s219 = scalar_select %p218, %s23, 1
        %s220 = smul.addr %s219, 32
        %s221 = smul.addr %s220, 8
        %s222 = scalar_lea.vmem %s0, %s221
        %p223 = scmp.lt.s32.totalorder %s23, 1
        %s224 = scalar_select %p223, %s23, 1
        %p225 = scmp.lt.s32.totalorder %s24, 1
        %s226 = scalar_select %p225, %s24, 1
        %s227 = smul.addr %s224, 2
        %s228 = sadd.s32 %s226, %s227
        %s229 = smul.addr %s228, 8
        %s230 = scalar_lea.vmem %s4, %s229
        %p231 = scmp.eq.s32.totalorder %s24, 0
        // Predicated region
        $region33: #{tpu_custom_call.1} parent=31 // pred_check
          %p232 = pneg %p231
        $region34: #{tpu_custom_call.1} parent=31 // pred_check_branch
          %234 = sbr.rel (%p232) target = $region36
        $region35: #{tpu_custom_call.1} parent=31 // pred_region
          %vm235 = vcmask 31744
          %236 = vst.msk [vmem:[#allocation2] sm:$0xff] %vm235, 0.0
          %237 = vst.msk [vmem:[#allocation2 + $0x8] sm:$0xff] %vm235, 0.0
          %vm238 = vcmask 25600
          %239 = vst.msk [vmem:[#allocation2 + $0x10] sm:$0x3] %vm238, 0.0
          %240 = vst.msk [vmem:[#allocation2 + $0x18] sm:$0xff] %vm235, 0.0
          %241 = vst.msk [vmem:[#allocation2 + $0x20] sm:$0xff] %vm235, 0.0
          %242 = vst.msk [vmem:[#allocation2 + $0x28] sm:$0x3] %vm238, 0.0
          %243 = vst.msk [vmem:[#allocation2 + $0x30] sm:$0xff] %vm235, 0.0
          %244 = vst.msk [vmem:[#allocation2 + $0x38] sm:$0xff] %vm235, 0.0
          %245 = vst.msk [vmem:[#allocation2 + $0x40] sm:$0x3] %vm238, 0.0
          %246 = vst.msk [vmem:[#allocation2 + $0x48] sm:$0xff] %vm235, 0.0
          %247 = vst.msk [vmem:[#allocation2 + $0x50] sm:$0xff] %vm235, 0.0
          %248 = vst.msk [vmem:[#allocation2 + $0x58] sm:$0x3] %vm238, 0.0
          %249 = vst.msk [vmem:[#allocation2 + $0x60] sm:$0xff] %vm235, 0.0
          %250 = vst.msk [vmem:[#allocation2 + $0x68] sm:$0xff] %vm235, 0.0
          %251 = vst.msk [vmem:[#allocation2 + $0x70] sm:$0x3] %vm238, 0.0
          %252 = vst.msk [vmem:[#allocation2 + $0x78] sm:$0xff] %vm235, 0.0
          %253 = vst.msk [vmem:[#allocation2 + $0x80] sm:$0xff] %vm235, 0.0
          %254 = vst.msk [vmem:[#allocation2 + $0x88] sm:$0x3] %vm238, 0.0
          %255 = vst.msk [vmem:[#allocation2 + $0x90] sm:$0xff] %vm235, 0.0
          %256 = vst.msk [vmem:[#allocation2 + $0x98] sm:$0xff] %vm235, 0.0
          %257 = vst.msk [vmem:[#allocation2 + $0xa0] sm:$0x3] %vm238, 0.0
          %258 = vst.msk [vmem:[#allocation2 + $0xa8] sm:$0xff] %vm235, 0.0
          %259 = vst.msk [vmem:[#allocation2 + $0xb0] sm:$0xff] %vm235, 0.0
          %260 = vst.msk [vmem:[#allocation2 + $0xb8] sm:$0x3] %vm238, 0.0
          %261 = vst.msk [vmem:[#allocation2 + $0xc0] sm:$0xff] %vm235, 0.0
          %262 = vst.msk [vmem:[#allocation2 + $0xc8] sm:$0xff] %vm235, 0.0
          %263 = vst.msk [vmem:[#allocation2 + $0xd0] sm:$0x3] %vm238, 0.0
          %264 = vst.msk [vmem:[#allocation2 + $0xd8] sm:$0xff] %vm235, 0.0
          %265 = vst.msk [vmem:[#allocation2 + $0xe0] sm:$0xff] %vm235, 0.0
          %266 = vst.msk [vmem:[#allocation2 + $0xe8] sm:$0x3] %vm238, 0.0
          %267 = vst.msk [vmem:[#allocation2 + $0xf0] sm:$0xff] %vm235, 0.0
          %268 = vst.msk [vmem:[#allocation2 + $0xf8] sm:$0xff] %vm235, 0.0
          %269 = vst.msk [vmem:[#allocation2 + $0x100] sm:$0x3] %vm238, 0.0
          %270 = vst.msk [vmem:[#allocation2 + $0x108] sm:$0xff] %vm235, 0.0
          %271 = vst.msk [vmem:[#allocation2 + $0x110] sm:$0xff] %vm235, 0.0
          %272 = vst.msk [vmem:[#allocation2 + $0x118] sm:$0x3] %vm238, 0.0
          %273 = vst.msk [vmem:[#allocation2 + $0x120] sm:$0xff] %vm235, 0.0
          %274 = vst.msk [vmem:[#allocation2 + $0x128] sm:$0xff] %vm235, 0.0
          %275 = vst.msk [vmem:[#allocation2 + $0x130] sm:$0x3] %vm238, 0.0
          %276 = vst.msk [vmem:[#allocation2 + $0x138] sm:$0xff] %vm235, 0.0
          %277 = vst.msk [vmem:[#allocation2 + $0x140] sm:$0xff] %vm235, 0.0
          %278 = vst.msk [vmem:[#allocation2 + $0x148] sm:$0x3] %vm238, 0.0
          %279 = vst.msk [vmem:[#allocation2 + $0x150] sm:$0xff] %vm235, 0.0
          %280 = vst.msk [vmem:[#allocation2 + $0x158] sm:$0xff] %vm235, 0.0
          %281 = vst.msk [vmem:[#allocation2 + $0x160] sm:$0x3] %vm238, 0.0
          %282 = vst.msk [vmem:[#allocation2 + $0x168] sm:$0xff] %vm235, 0.0
          %283 = vst.msk [vmem:[#allocation2 + $0x170] sm:$0xff] %vm235, 0.0
          %284 = vst.msk [vmem:[#allocation2 + $0x178] sm:$0x3] %vm238, 0.0
          %285 = vst.msk [vmem:[#allocation2 + $0x180] sm:$0xff] %vm235, 0.0
          %286 = vst.msk [vmem:[#allocation2 + $0x188] sm:$0xff] %vm235, 0.0
          %287 = vst.msk [vmem:[#allocation2 + $0x190] sm:$0x3] %vm238, 0.0
          %288 = vst.msk [vmem:[#allocation2 + $0x198] sm:$0xff] %vm235, 0.0
          %289 = vst.msk [vmem:[#allocation2 + $0x1a0] sm:$0xff] %vm235, 0.0
          %290 = vst.msk [vmem:[#allocation2 + $0x1a8] sm:$0x3] %vm238, 0.0
          %v291 = vld [vmem:[%s222] sm:$0xff]
          %v292 = vld [vmem:[%s222 + $0x8] sm:$0xff]
          %v293 = vld [vmem:[%s222 + $0x10] sm:$0xff]
          %v294 = vld [vmem:[%s222 + $0x18] sm:$0xff]
          %v295 = vld [vmem:[%s222 + $0x20] sm:$0xff]
          %v296 = vld [vmem:[%s222 + $0x28] sm:$0xff]
          %v297 = vld [vmem:[%s222 + $0x30] sm:$0xff]
          %v298 = vld [vmem:[%s222 + $0x38] sm:$0xff]
          %v299 = vld [vmem:[%s222 + $0x40] sm:$0xff]
          %v300 = vld [vmem:[%s222 + $0x48] sm:$0xff]
          %v301 = vld [vmem:[%s222 + $0x50] sm:$0xff]
          %v302 = vld [vmem:[%s222 + $0x58] sm:$0xff]
          %v303 = vld [vmem:[%s222 + $0x60] sm:$0xff]
          %v304 = vld [vmem:[%s222 + $0x68] sm:$0xff]
          %v305 = vld [vmem:[%s222 + $0x70] sm:$0xff]
          %v306 = vld [vmem:[%s222 + $0x78] sm:$0xff]
          %v307 = vld [vmem:[%s222 + $0x80] sm:$0xff]
          %v308 = vld [vmem:[%s222 + $0x88] sm:$0xff]
          %v309 = vld [vmem:[%s222 + $0x90] sm:$0xff]
          %v310 = vld [vmem:[%s222 + $0x98] sm:$0xff]
          %v311 = vld [vmem:[%s222 + $0xa0] sm:$0xff]
          %v312 = vld [vmem:[%s222 + $0xa8] sm:$0xff]
          %v313 = vld [vmem:[%s222 + $0xb0] sm:$0xff]
          %v314 = vld [vmem:[%s222 + $0xb8] sm:$0xff]
          %v315 = vld [vmem:[%s222 + $0xc0] sm:$0xff]
          %v316 = vld [vmem:[%s222 + $0xc8] sm:$0xff]
          %v317 = vld [vmem:[%s222 + $0xd0] sm:$0xff]
          %v318 = vld [vmem:[%s222 + $0xd8] sm:$0xff]
          %v319 = vld [vmem:[%s222 + $0xe0] sm:$0xff]
          %v320 = vld [vmem:[%s222 + $0xe8] sm:$0xff]
          %v321 = vld [vmem:[%s222 + $0xf0] sm:$0xff]
          %v322 = vld [vmem:[%s222 + $0xf8] sm:$0xff]
          %s323 = scalar_lea.vmem [#allocation2], 24
          %324 = vst.msk [vmem:[%s323 + $0x1] sm:$0xff] %vm235, %v291
          %325 = vst.msk [vmem:[%s323 + $0x9] sm:$0xff] %vm235, %v292
          %326 = vst.msk [vmem:[%s323 + $0x19] sm:$0xff] %vm235, %v293
          %327 = vst.msk [vmem:[%s323 + $0x21] sm:$0xff] %vm235, %v294
          %328 = vst.msk [vmem:[%s323 + $0x31] sm:$0xff] %vm235, %v295
          %329 = vst.msk [vmem:[%s323 + $0x39] sm:$0xff] %vm235, %v296
          %330 = vst.msk [vmem:[%s323 + $0x49] sm:$0xff] %vm235, %v297
          %331 = vst.msk [vmem:[%s323 + $0x51] sm:$0xff] %vm235, %v298
          %332 = vst.msk [vmem:[%s323 + $0x61] sm:$0xff] %vm235, %v299
          %333 = vst.msk [vmem:[%s323 + $0x69] sm:$0xff] %vm235, %v300
          %334 = vst.msk [vmem:[%s323 + $0x79] sm:$0xff] %vm235, %v301
          %335 = vst.msk [vmem:[%s323 + $0x81] sm:$0xff] %vm235, %v302
          %336 = vst.msk [vmem:[%s323 + $0x91] sm:$0xff] %vm235, %v303
          %337 = vst.msk [vmem:[%s323 + $0x99] sm:$0xff] %vm235, %v304
          %338 = vst.msk [vmem:[%s323 + $0xa9] sm:$0xff] %vm235, %v305
          %339 = vst.msk [vmem:[%s323 + $0xb1] sm:$0xff] %vm235, %v306
          %340 = vst.msk [vmem:[%s323 + $0xc1] sm:$0xff] %vm235, %v307
          %341 = vst.msk [vmem:[%s323 + $0xc9] sm:$0xff] %vm235, %v308
          %342 = vst.msk [vmem:[%s323 + $0xd9] sm:$0xff] %vm235, %v309
          %343 = vst.msk [vmem:[%s323 + $0xe1] sm:$0xff] %vm235, %v310
          %344 = vst.msk [vmem:[%s323 + $0xf1] sm:$0xff] %vm235, %v311
          %345 = vst.msk [vmem:[%s323 + $0xf9] sm:$0xff] %vm235, %v312
          %346 = vst.msk [vmem:[%s323 + $0x109] sm:$0xff] %vm235, %v313
          %347 = vst.msk [vmem:[%s323 + $0x111] sm:$0xff] %vm235, %v314
          %348 = vst.msk [vmem:[%s323 + $0x121] sm:$0xff] %vm235, %v315
          %349 = vst.msk [vmem:[%s323 + $0x129] sm:$0xff] %vm235, %v316
          %350 = vst.msk [vmem:[%s323 + $0x139] sm:$0xff] %vm235, %v317
          %351 = vst.msk [vmem:[%s323 + $0x141] sm:$0xff] %vm235, %v318
          %352 = vst.msk [vmem:[%s323 + $0x151] sm:$0xff] %vm235, %v319
          %353 = vst.msk [vmem:[%s323 + $0x159] sm:$0xff] %vm235, %v320
          %354 = vst.msk [vmem:[%s323 + $0x169] sm:$0xff] %vm235, %v321
          %355 = vst.msk [vmem:[%s323 + $0x171] sm:$0xff] %vm235, %v322
        $region36: #{tpu_custom_call.1} parent=31 // pred_fallthru
          _
        %s356 = smul.u32 %s24, 8
        %s357 = smul.u32 %s356, 24
        %s358 = scalar_lea.vmem [#allocation2], %s357
        %v359 = vld [vmem:[%s358] sm:$0xff]
        %v360 = vld [vmem:[%s358 + $0x8] sm:$0xff]
        %v361 = vld [vmem:[%s358 + $0x10] sm:$0x3]
        %v362 = vld [vmem:[%s358 + $0x18] sm:$0xff]
        %v363 = vld [vmem:[%s358 + $0x20] sm:$0xff]
        %v364 = vld [vmem:[%s358 + $0x28] sm:$0x3]
        %v365 = vld [vmem:[%s358 + $0x30] sm:$0xff]
        %v366 = vld [vmem:[%s358 + $0x38] sm:$0xff]
        %v367 = vld [vmem:[%s358 + $0x40] sm:$0x3]
        %v368 = vld [vmem:[%s358 + $0x48] sm:$0xff]
        %v369 = vld [vmem:[%s358 + $0x50] sm:$0xff]
        %v370 = vld [vmem:[%s358 + $0x58] sm:$0x3]
        %v371 = vld [vmem:[%s358 + $0x60] sm:$0xff]
        %v372 = vld [vmem:[%s358 + $0x68] sm:$0xff]
        %v373 = vld [vmem:[%s358 + $0x70] sm:$0x3]
        %v374 = vld [vmem:[%s358 + $0x78] sm:$0xff]
        %v375 = vld [vmem:[%s358 + $0x80] sm:$0xff]
        %v376 = vld [vmem:[%s358 + $0x88] sm:$0x3]
        %v377 = vld [vmem:[%s358 + $0x90] sm:$0xff]
        %v378 = vld [vmem:[%s358 + $0x98] sm:$0xff]
        %v379 = vld [vmem:[%s358 + $0xa0] sm:$0x3]
        %v380 = vld [vmem:[%s358 + $0xa8] sm:$0xff]
        %v381 = vld [vmem:[%s358 + $0xb0] sm:$0xff]
        %v382 = vld [vmem:[%s358 + $0xb8] sm:$0x3]
        %v383 = vld [vmem:[%s358 + $0xc0] sm:$0xff]
        %v384 = vld [vmem:[%s358 + $0xc8] sm:$0xff]
        %v385 = vld [vmem:[%s358 + $0xd0] sm:$0x3]
        %v386 = vld [vmem:[%s358 + $0xd8] sm:$0xff]
        %v387 = vld [vmem:[%s358 + $0xe0] sm:$0xff]
        %v388 = vld [vmem:[%s358 + $0xe8] sm:$0x3]
        %v389 = vld [vmem:[%s1] sm:$0x7]
        %v390 = vld [vmem:[%s1 + $0x4] sm:$0x7]
        %v391 = vld [vmem:[%s1 + $0x8] sm:$0x7]
        %v392 = vlaneseq
        %v393 = vshrl.u32 %v392, 7
        %v394 = vsub.s32 0, %v393
        %v395 = vrot.slane %v389, %v394
        %v396 = vmul.f32 %v359, %v395
        %v397 = vmul.f32 %v360, %v395
        %v398 = vmul.f32 %v362, %v395
        %v399 = vmul.f32 %v363, %v395
        %v400 = vmul.f32 %v365, %v395
        %v401 = vmul.f32 %v366, %v395
        %v402 = vmul.f32 %v368, %v395
        %v403 = vmul.f32 %v369, %v395
        %v404 = vmul.f32 %v371, %v395
        %v405 = vmul.f32 %v372, %v395
        %v406 = vmul.f32 %v374, %v395
        %v407 = vmul.f32 %v375, %v395
        %v408 = vmul.f32 %v377, %v395
        %v409 = vmul.f32 %v378, %v395
        %v410 = vmul.f32 %v380, %v395
        %v411 = vmul.f32 %v381, %v395
        %v412 = vadd.f32 %v396, 0.0
        %v413 = vadd.f32 %v397, 0.0
        %v414 = vadd.f32 %v398, 0.0
        %v415 = vadd.f32 %v399, 0.0
        %v416 = vadd.f32 %v400, 0.0
        %v417 = vadd.f32 %v401, 0.0
        %v418 = vadd.f32 %v402, 0.0
        %v419 = vadd.f32 %v403, 0.0
        %v420 = vadd.f32 %v404, 0.0
        %v421 = vadd.f32 %v405, 0.0
        %v422 = vadd.f32 %v406, 0.0
        %v423 = vadd.f32 %v407, 0.0
        %v424 = vadd.f32 %v408, 0.0
        %v425 = vadd.f32 %v409, 0.0
        %v426 = vadd.f32 %v410, 0.0
        %v427 = vadd.f32 %v411, 0.0
        %v428 = vlaneseq
        %v429 = vshrl.u32 %v428, 7
        %v430 = vsub.s32 1, %v429
        %v431 = vrot.slane %v389, %v430
        %v432 = vmul.f32 %v359, %v431
        %v433 = vmul.f32 %v360, %v431
        %v434 = vmul.f32 %v361, %v431
        %v435 = vmul.f32 %v362, %v431
        %v436 = vmul.f32 %v363, %v431
        %v437 = vmul.f32 %v364, %v431
        %v438 = vmul.f32 %v365, %v431
        %v439 = vmul.f32 %v366, %v431
        %v440 = vmul.f32 %v367, %v431
        %v441 = vmul.f32 %v368, %v431
        %v442 = vmul.f32 %v369, %v431
        %v443 = vmul.f32 %v370, %v431
        %v444 = vmul.f32 %v371, %v431
        %v445 = vmul.f32 %v372, %v431
        %v446 = vmul.f32 %v373, %v431
        %v447 = vmul.f32 %v374, %v431
        %v448 = vmul.f32 %v375, %v431
        %v449 = vmul.f32 %v376, %v431
        %v450 = vmul.f32 %v377, %v431
        %v451 = vmul.f32 %v378, %v431
        %v452 = vmul.f32 %v379, %v431
        %v453 = vmul.f32 %v380, %v431
        %v454 = vmul.f32 %v381, %v431
        %v455 = vmul.f32 %v382, %v431
        %vm480 = vcmask 1046528
        %v481 = vrot.slane %v432, 1
        %v482 = vrot.slane %v433, 1
        %v483 = vsel %vm480, %v481, %v482
        %v484 = vrot.slane %v434, 1
        %v485 = vsel %vm480, %v482, %v484
        %v486 = vrot.slane %v435, 1
        %v487 = vrot.slane %v436, 1
        %v488 = vsel %vm480, %v486, %v487
        %v489 = vrot.slane %v437, 1
        %v490 = vsel %vm480, %v487, %v489
        %v491 = vrot.slane %v438, 1
        %v492 = vrot.slane %v439, 1
        %v493 = vsel %vm480, %v491, %v492
        %v494 = vrot.slane %v440, 1
        %v495 = vsel %vm480, %v492, %v494
        %v496 = vrot.slane %v441, 1
        %v497 = vrot.slane %v442, 1
        %v498 = vsel %vm480, %v496, %v497
        %v499 = vrot.slane %v443, 1
        %v500 = vsel %vm480, %v497, %v499
        %v501 = vrot.slane %v444, 1
        %v502 = vrot.slane %v445, 1
        %v503 = vsel %vm480, %v501, %v502
        %v504 = vrot.slane %v446, 1
        %v505 = vsel %vm480, %v502, %v504
        %v506 = vrot.slane %v447, 1
        %v507 = vrot.slane %v448, 1
        %v508 = vsel %vm480, %v506, %v507
        %v509 = vrot.slane %v449, 1
        %v510 = vsel %vm480, %v507, %v509
        %v511 = vrot.slane %v450, 1
        %v512 = vrot.slane %v451, 1
        %v513 = vsel %vm480, %v511, %v512
        %v514 = vrot.slane %v452, 1
        %v515 = vsel %vm480, %v512, %v514
        %v516 = vrot.slane %v453, 1
        %v517 = vrot.slane %v454, 1
        %v518 = vsel %vm480, %v516, %v517
        %v519 = vrot.slane %v455, 1
        %v520 = vsel %vm480, %v517, %v519
        %v537 = vadd.f32 %v412, %v483
        %v538 = vadd.f32 %v413, %v485
        %v539 = vadd.f32 %v414, %v488
        %v540 = vadd.f32 %v415, %v490
        %v541 = vadd.f32 %v416, %v493
        %v542 = vadd.f32 %v417, %v495
        %v543 = vadd.f32 %v418, %v498
        %v544 = vadd.f32 %v419, %v500
        %v545 = vadd.f32 %v420, %v503
        %v546 = vadd.f32 %v421, %v505
        %v547 = vadd.f32 %v422, %v508
        %v548 = vadd.f32 %v423, %v510
        %v549 = vadd.f32 %v424, %v513
        %v550 = vadd.f32 %v425, %v515
        %v551 = vadd.f32 %v426, %v518
        %v552 = vadd.f32 %v427, %v520
        %v553 = vlaneseq
        %v554 = vshrl.u32 %v553, 7
        %v555 = vsub.s32 2, %v554
        %v556 = vrot.slane %v389, %v555
        %v557 = vmul.f32 %v359, %v556
        %v558 = vmul.f32 %v360, %v556
        %v559 = vmul.f32 %v361, %v556
        %v560 = vmul.f32 %v362, %v556
        %v561 = vmul.f32 %v363, %v556
        %v562 = vmul.f32 %v364, %v556
        %v563 = vmul.f32 %v365, %v556
        %v564 = vmul.f32 %v366, %v556
        %v565 = vmul.f32 %v367, %v556
        %v566 = vmul.f32 %v368, %v556
        %v567 = vmul.f32 %v369, %v556
        %v568 = vmul.f32 %v370, %v556
        %v569 = vmul.f32 %v371, %v556
        %v570 = vmul.f32 %v372, %v556
        %v571 = vmul.f32 %v373, %v556
        %v572 = vmul.f32 %v374, %v556
        %v573 = vmul.f32 %v375, %v556
        %v574 = vmul.f32 %v376, %v556
        %v575 = vmul.f32 %v377, %v556
        %v576 = vmul.f32 %v378, %v556
        %v577 = vmul.f32 %v379, %v556
        %v578 = vmul.f32 %v380, %v556
        %v579 = vmul.f32 %v381, %v556
        %v580 = vmul.f32 %v382, %v556
        %vm605 = vcmask 1045504
        %v606 = vrot.slane %v557, 2
        %v607 = vrot.slane %v558, 2
        %v608 = vsel %vm605, %v606, %v607
        %v609 = vrot.slane %v559, 2
        %v610 = vsel %vm605, %v607, %v609
        %v611 = vrot.slane %v560, 2
        %v612 = vrot.slane %v561, 2
        %v613 = vsel %vm605, %v611, %v612
        %v614 = vrot.slane %v562, 2
        %v615 = vsel %vm605, %v612, %v614
        %v616 = vrot.slane %v563, 2
        %v617 = vrot.slane %v564, 2
        %v618 = vsel %vm605, %v616, %v617
        %v619 = vrot.slane %v565, 2
        %v620 = vsel %vm605, %v617, %v619
        %v621 = vrot.slane %v566, 2
        %v622 = vrot.slane %v567, 2
        %v623 = vsel %vm605, %v621, %v622
        %v624 = vrot.slane %v568, 2
        %v625 = vsel %vm605, %v622, %v624
        %v626 = vrot.slane %v569, 2
        %v627 = vrot.slane %v570, 2
        %v628 = vsel %vm605, %v626, %v627
        %v629 = vrot.slane %v571, 2
        %v630 = vsel %vm605, %v627, %v629
        %v631 = vrot.slane %v572, 2
        %v632 = vrot.slane %v573, 2
        %v633 = vsel %vm605, %v631, %v632
        %v634 = vrot.slane %v574, 2
        %v635 = vsel %vm605, %v632, %v634
        %v636 = vrot.slane %v575, 2
        %v637 = vrot.slane %v576, 2
        %v638 = vsel %vm605, %v636, %v637
        %v639 = vrot.slane %v577, 2
        %v640 = vsel %vm605, %v637, %v639
        %v641 = vrot.slane %v578, 2
        %v642 = vrot.slane %v579, 2
        %v643 = vsel %vm605, %v641, %v642
        %v644 = vrot.slane %v580, 2
        %v645 = vsel %vm605, %v642, %v644
        %v662 = vadd.f32 %v537, %v608
        %v663 = vadd.f32 %v538, %v610
        %v664 = vadd.f32 %v539, %v613
        %v665 = vadd.f32 %v540, %v615
        %v666 = vadd.f32 %v541, %v618
        %v667 = vadd.f32 %v542, %v620
        %v668 = vadd.f32 %v543, %v623
        %v669 = vadd.f32 %v544, %v625
        %v670 = vadd.f32 %v545, %v628
        %v671 = vadd.f32 %v546, %v630
        %v672 = vadd.f32 %v547, %v633
        %v673 = vadd.f32 %v548, %v635
        %v674 = vadd.f32 %v549, %v638
        %v675 = vadd.f32 %v550, %v640
        %v676 = vadd.f32 %v551, %v643
        %v677 = vadd.f32 %v552, %v645
        %v678 = vlaneseq
        %v679 = vshrl.u32 %v678, 7
        %v680 = vsub.s32 0, %v679
        %v681 = vrot.slane %v390, %v680
        %v682 = vmul.f32 %v362, %v681
        %v683 = vmul.f32 %v363, %v681
        %v684 = vmul.f32 %v365, %v681
        %v685 = vmul.f32 %v366, %v681
        %v686 = vmul.f32 %v368, %v681
        %v687 = vmul.f32 %v369, %v681
        %v688 = vmul.f32 %v371, %v681
        %v689 = vmul.f32 %v372, %v681
        %v690 = vmul.f32 %v374, %v681
        %v691 = vmul.f32 %v375, %v681
        %v692 = vmul.f32 %v377, %v681
        %v693 = vmul.f32 %v378, %v681
        %v694 = vmul.f32 %v380, %v681
        %v695 = vmul.f32 %v381, %v681
        %v696 = vmul.f32 %v383, %v681
        %v697 = vmul.f32 %v384, %v681
        %v698 = vadd.f32 %v662, %v682
        %v699 = vadd.f32 %v663, %v683
        %v700 = vadd.f32 %v664, %v684
        %v701 = vadd.f32 %v665, %v685
        %v702 = vadd.f32 %v666, %v686
        %v703 = vadd.f32 %v667, %v687
        %v704 = vadd.f32 %v668, %v688
        %v705 = vadd.f32 %v669, %v689
        %v706 = vadd.f32 %v670, %v690
        %v707 = vadd.f32 %v671, %v691
        %v708 = vadd.f32 %v672, %v692
        %v709 = vadd.f32 %v673, %v693
        %v710 = vadd.f32 %v674, %v694
        %v711 = vadd.f32 %v675, %v695
        %v712 = vadd.f32 %v676, %v696
        %v713 = vadd.f32 %v677, %v697
        %v714 = vlaneseq
        %v715 = vshrl.u32 %v714, 7
        %v716 = vsub.s32 1, %v715
        %v717 = vrot.slane %v390, %v716
        %v718 = vmul.f32 %v362, %v717
        %v719 = vmul.f32 %v363, %v717
        %v720 = vmul.f32 %v364, %v717
        %v721 = vmul.f32 %v365, %v717
        %v722 = vmul.f32 %v366, %v717
        %v723 = vmul.f32 %v367, %v717
        %v724 = vmul.f32 %v368, %v717
        %v725 = vmul.f32 %v369, %v717
        %v726 = vmul.f32 %v370, %v717
        %v727 = vmul.f32 %v371, %v717
        %v728 = vmul.f32 %v372, %v717
        %v729 = vmul.f32 %v373, %v717
        %v730 = vmul.f32 %v374, %v717
        %v731 = vmul.f32 %v375, %v717
        %v732 = vmul.f32 %v376, %v717
        %v733 = vmul.f32 %v377, %v717
        %v734 = vmul.f32 %v378, %v717
        %v735 = vmul.f32 %v379, %v717
        %v736 = vmul.f32 %v380, %v717
        %v737 = vmul.f32 %v381, %v717
        %v738 = vmul.f32 %v382, %v717
        %v739 = vmul.f32 %v383, %v717
        %v740 = vmul.f32 %v384, %v717
        %v741 = vmul.f32 %v385, %v717
        %v766 = vrot.slane %v718, 1
        %v767 = vrot.slane %v719, 1
        %v768 = vsel %vm480, %v766, %v767
        %v769 = vrot.slane %v720, 1
        %v770 = vsel %vm480, %v767, %v769
        %v771 = vrot.slane %v721, 1
        %v772 = vrot.slane %v722, 1
        %v773 = vsel %vm480, %v771, %v772
        %v774 = vrot.slane %v723, 1
        %v775 = vsel %vm480, %v772, %v774
        %v776 = vrot.slane %v724, 1
        %v777 = vrot.slane %v725, 1
        %v778 = vsel %vm480, %v776, %v777
        %v779 = vrot.slane %v726, 1
        %v780 = vsel %vm480, %v777, %v779
        %v781 = vrot.slane %v727, 1
        %v782 = vrot.slane %v728, 1
        %v783 = vsel %vm480, %v781, %v782
        %v784 = vrot.slane %v729, 1
        %v785 = vsel %vm480, %v782, %v784
        %v786 = vrot.slane %v730, 1
        %v787 = vrot.slane %v731, 1
        %v788 = vsel %vm480, %v786, %v787
        %v789 = vrot.slane %v732, 1
        %v790 = vsel %vm480, %v787, %v789
        %v791 = vrot.slane %v733, 1
        %v792 = vrot.slane %v734, 1
        %v793 = vsel %vm480, %v791, %v792
        %v794 = vrot.slane %v735, 1
        %v795 = vsel %vm480, %v792, %v794
        %v796 = vrot.slane %v736, 1
        %v797 = vrot.slane %v737, 1
        %v798 = vsel %vm480, %v796, %v797
        %v799 = vrot.slane %v738, 1
        %v800 = vsel %vm480, %v797, %v799
        %v801 = vrot.slane %v739, 1
        %v802 = vrot.slane %v740, 1
        %v803 = vsel %vm480, %v801, %v802
        %v804 = vrot.slane %v741, 1
        %v805 = vsel %vm480, %v802, %v804
        %v822 = vadd.f32 %v698, %v768
        %v823 = vadd.f32 %v699, %v770
        %v824 = vadd.f32 %v700, %v773
        %v825 = vadd.f32 %v701, %v775
        %v826 = vadd.f32 %v702, %v778
        %v827 = vadd.f32 %v703, %v780
        %v828 = vadd.f32 %v704, %v783
        %v829 = vadd.f32 %v705, %v785
        %v830 = vadd.f32 %v706, %v788
        %v831 = vadd.f32 %v707, %v790
        %v832 = vadd.f32 %v708, %v793
        %v833 = vadd.f32 %v709, %v795
        %v834 = vadd.f32 %v710, %v798
        %v835 = vadd.f32 %v711, %v800
        %v836 = vadd.f32 %v712, %v803
        %v837 = vadd.f32 %v713, %v805
        %v838 = vlaneseq
        %v839 = vshrl.u32 %v838, 7
        %v840 = vsub.s32 2, %v839
        %v841 = vrot.slane %v390, %v840
        %v842 = vmul.f32 %v362, %v841
        %v843 = vmul.f32 %v363, %v841
        %v844 = vmul.f32 %v364, %v841
        %v845 = vmul.f32 %v365, %v841
        %v846 = vmul.f32 %v366, %v841
        %v847 = vmul.f32 %v367, %v841
        %v848 = vmul.f32 %v368, %v841
        %v849 = vmul.f32 %v369, %v841
        %v850 = vmul.f32 %v370, %v841
        %v851 = vmul.f32 %v371, %v841
        %v852 = vmul.f32 %v372, %v841
        %v853 = vmul.f32 %v373, %v841
        %v854 = vmul.f32 %v374, %v841
        %v855 = vmul.f32 %v375, %v841
        %v856 = vmul.f32 %v376, %v841
        %v857 = vmul.f32 %v377, %v841
        %v858 = vmul.f32 %v378, %v841
        %v859 = vmul.f32 %v379, %v841
        %v860 = vmul.f32 %v380, %v841
        %v861 = vmul.f32 %v381, %v841
        %v862 = vmul.f32 %v382, %v841
        %v863 = vmul.f32 %v383, %v841
        %v864 = vmul.f32 %v384, %v841
        %v865 = vmul.f32 %v385, %v841
        %v890 = vrot.slane %v842, 2
        %v891 = vrot.slane %v843, 2
        %v892 = vsel %vm605, %v890, %v891
        %v893 = vrot.slane %v844, 2
        %v894 = vsel %vm605, %v891, %v893
        %v895 = vrot.slane %v845, 2
        %v896 = vrot.slane %v846, 2
        %v897 = vsel %vm605, %v895, %v896
        %v898 = vrot.slane %v847, 2
        %v899 = vsel %vm605, %v896, %v898
        %v900 = vrot.slane %v848, 2
        %v901 = vrot.slane %v849, 2
        %v902 = vsel %vm605, %v900, %v901
        %v903 = vrot.slane %v850, 2
        %v904 = vsel %vm605, %v901, %v903
        %v905 = vrot.slane %v851, 2
        %v906 = vrot.slane %v852, 2
        %v907 = vsel %vm605, %v905, %v906
        %v908 = vrot.slane %v853, 2
        %v909 = vsel %vm605, %v906, %v908
        %v910 = vrot.slane %v854, 2
        %v911 = vrot.slane %v855, 2
        %v912 = vsel %vm605, %v910, %v911
        %v913 = vrot.slane %v856, 2
        %v914 = vsel %vm605, %v911, %v913
        %v915 = vrot.slane %v857, 2
        %v916 = vrot.slane %v858, 2
        %v917 = vsel %vm605, %v915, %v916
        %v918 = vrot.slane %v859, 2
        %v919 = vsel %vm605, %v916, %v918
        %v920 = vrot.slane %v860, 2
        %v921 = vrot.slane %v861, 2
        %v922 = vsel %vm605, %v920, %v921
        %v923 = vrot.slane %v862, 2
        %v924 = vsel %vm605, %v921, %v923
        %v925 = vrot.slane %v863, 2
        %v926 = vrot.slane %v864, 2
        %v927 = vsel %vm605, %v925, %v926
        %v928 = vrot.slane %v865, 2
        %v929 = vsel %vm605, %v926, %v928
        %v946 = vadd.f32 %v822, %v892
        %v947 = vadd.f32 %v823, %v894
        %v948 = vadd.f32 %v824, %v897
        %v949 = vadd.f32 %v825, %v899
        %v950 = vadd.f32 %v826, %v902
        %v951 = vadd.f32 %v827, %v904
        %v952 = vadd.f32 %v828, %v907
        %v953 = vadd.f32 %v829, %v909
        %v954 = vadd.f32 %v830, %v912
        %v955 = vadd.f32 %v831, %v914
        %v956 = vadd.f32 %v832, %v917
        %v957 = vadd.f32 %v833, %v919
        %v958 = vadd.f32 %v834, %v922
        %v959 = vadd.f32 %v835, %v924
        %v960 = vadd.f32 %v836, %v927
        %v961 = vadd.f32 %v837, %v929
        %v962 = vlaneseq
        %v963 = vshrl.u32 %v962, 7
        %v964 = vsub.s32 0, %v963
        %v965 = vrot.slane %v391, %v964
        %v966 = vmul.f32 %v365, %v965
        %v967 = vmul.f32 %v366, %v965
        %v968 = vmul.f32 %v368, %v965
        %v969 = vmul.f32 %v369, %v965
        %v970 = vmul.f32 %v371, %v965
        %v971 = vmul.f32 %v372, %v965
        %v972 = vmul.f32 %v374, %v965
        %v973 = vmul.f32 %v375, %v965
        %v974 = vmul.f32 %v377, %v965
        %v975 = vmul.f32 %v378, %v965
        %v976 = vmul.f32 %v380, %v965
        %v977 = vmul.f32 %v381, %v965
        %v978 = vmul.f32 %v383, %v965
        %v979 = vmul.f32 %v384, %v965
        %v980 = vmul.f32 %v386, %v965
        %v981 = vmul.f32 %v387, %v965
        %v982 = vadd.f32 %v946, %v966
        %v983 = vadd.f32 %v947, %v967
        %v984 = vadd.f32 %v948, %v968
        %v985 = vadd.f32 %v949, %v969
        %v986 = vadd.f32 %v950, %v970
        %v987 = vadd.f32 %v951, %v971
        %v988 = vadd.f32 %v952, %v972
        %v989 = vadd.f32 %v953, %v973
        %v990 = vadd.f32 %v954, %v974
        %v991 = vadd.f32 %v955, %v975
        %v992 = vadd.f32 %v956, %v976
        %v993 = vadd.f32 %v957, %v977
        %v994 = vadd.f32 %v958, %v978
        %v995 = vadd.f32 %v959, %v979
        %v996 = vadd.f32 %v960, %v980
        %v997 = vadd.f32 %v961, %v981
        %v998 = vlaneseq
        %v999 = vshrl.u32 %v998, 7
        %v1000 = vsub.s32 1, %v999
        %v1001 = vrot.slane %v391, %v1000
        %v1002 = vmul.f32 %v365, %v1001
        %v1003 = vmul.f32 %v366, %v1001
        %v1004 = vmul.f32 %v367, %v1001
        %v1005 = vmul.f32 %v368, %v1001
        %v1006 = vmul.f32 %v369, %v1001
        %v1007 = vmul.f32 %v370, %v1001
        %v1008 = vmul.f32 %v371, %v1001
        %v1009 = vmul.f32 %v372, %v1001
        %v1010 = vmul.f32 %v373, %v1001
        %v1011 = vmul.f32 %v374, %v1001
        %v1012 = vmul.f32 %v375, %v1001
        %v1013 = vmul.f32 %v376, %v1001
        %v1014 = vmul.f32 %v377, %v1001
        %v1015 = vmul.f32 %v378, %v1001
        %v1016 = vmul.f32 %v379, %v1001
        %v1017 = vmul.f32 %v380, %v1001
        %v1018 = vmul.f32 %v381, %v1001
        %v1019 = vmul.f32 %v382, %v1001
        %v1020 = vmul.f32 %v383, %v1001
        %v1021 = vmul.f32 %v384, %v1001
        %v1022 = vmul.f32 %v385, %v1001
        %v1023 = vmul.f32 %v386, %v1001
        %v1024 = vmul.f32 %v387, %v1001
        %v1025 = vmul.f32 %v388, %v1001
        %v1050 = vrot.slane %v1002, 1
        %v1051 = vrot.slane %v1003, 1
        %v1052 = vsel %vm480, %v1050, %v1051
        %v1053 = vrot.slane %v1004, 1
        %v1054 = vsel %vm480, %v1051, %v1053
        %v1055 = vrot.slane %v1005, 1
        %v1056 = vrot.slane %v1006, 1
        %v1057 = vsel %vm480, %v1055, %v1056
        %v1058 = vrot.slane %v1007, 1
        %v1059 = vsel %vm480, %v1056, %v1058
        %v1060 = vrot.slane %v1008, 1
        %v1061 = vrot.slane %v1009, 1
        %v1062 = vsel %vm480, %v1060, %v1061
        %v1063 = vrot.slane %v1010, 1
        %v1064 = vsel %vm480, %v1061, %v1063
        %v1065 = vrot.slane %v1011, 1
        %v1066 = vrot.slane %v1012, 1
        %v1067 = vsel %vm480, %v1065, %v1066
        %v1068 = vrot.slane %v1013, 1
        %v1069 = vsel %vm480, %v1066, %v1068
        %v1070 = vrot.slane %v1014, 1
        %v1071 = vrot.slane %v1015, 1
        %v1072 = vsel %vm480, %v1070, %v1071
        %v1073 = vrot.slane %v1016, 1
        %v1074 = vsel %vm480, %v1071, %v1073
        %v1075 = vrot.slane %v1017, 1
        %v1076 = vrot.slane %v1018, 1
        %v1077 = vsel %vm480, %v1075, %v1076
        %v1078 = vrot.slane %v1019, 1
        %v1079 = vsel %vm480, %v1076, %v1078
        %v1080 = vrot.slane %v1020, 1
        %v1081 = vrot.slane %v1021, 1
        %v1082 = vsel %vm480, %v1080, %v1081
        %v1083 = vrot.slane %v1022, 1
        %v1084 = vsel %vm480, %v1081, %v1083
        %v1085 = vrot.slane %v1023, 1
        %v1086 = vrot.slane %v1024, 1
        %v1087 = vsel %vm480, %v1085, %v1086
        %v1088 = vrot.slane %v1025, 1
        %v1089 = vsel %vm480, %v1086, %v1088
        %v1106 = vadd.f32 %v982, %v1052
        %v1107 = vadd.f32 %v983, %v1054
        %v1108 = vadd.f32 %v984, %v1057
        %v1109 = vadd.f32 %v985, %v1059
        %v1110 = vadd.f32 %v986, %v1062
        %v1111 = vadd.f32 %v987, %v1064
        %v1112 = vadd.f32 %v988, %v1067
        %v1113 = vadd.f32 %v989, %v1069
        %v1114 = vadd.f32 %v990, %v1072
        %v1115 = vadd.f32 %v991, %v1074
        %v1116 = vadd.f32 %v992, %v1077
        %v1117 = vadd.f32 %v993, %v1079
        %v1118 = vadd.f32 %v994, %v1082
        %v1119 = vadd.f32 %v995, %v1084
        %v1120 = vadd.f32 %v996, %v1087
        %v1121 = vadd.f32 %v997, %v1089
        %v1122 = vlaneseq
        %v1123 = vshrl.u32 %v1122, 7
        %v1124 = vsub.s32 2, %v1123
        %v1125 = vrot.slane %v391, %v1124
        %v1126 = vmul.f32 %v365, %v1125
        %v1127 = vmul.f32 %v366, %v1125
        %v1128 = vmul.f32 %v367, %v1125
        %v1129 = vmul.f32 %v368, %v1125
        %v1130 = vmul.f32 %v369, %v1125
        %v1131 = vmul.f32 %v370, %v1125
        %v1132 = vmul.f32 %v371, %v1125
        %v1133 = vmul.f32 %v372, %v1125
        %v1134 = vmul.f32 %v373, %v1125
        %v1135 = vmul.f32 %v374, %v1125
        %v1136 = vmul.f32 %v375, %v1125
        %v1137 = vmul.f32 %v376, %v1125
        %v1138 = vmul.f32 %v377, %v1125
        %v1139 = vmul.f32 %v378, %v1125
        %v1140 = vmul.f32 %v379, %v1125
        %v1141 = vmul.f32 %v380, %v1125
        %v1142 = vmul.f32 %v381, %v1125
        %v1143 = vmul.f32 %v382, %v1125
        %v1144 = vmul.f32 %v383, %v1125
        %v1145 = vmul.f32 %v384, %v1125
        %v1146 = vmul.f32 %v385, %v1125
        %v1147 = vmul.f32 %v386, %v1125
        %v1148 = vmul.f32 %v387, %v1125
        %v1149 = vmul.f32 %v388, %v1125
        %v1174 = vrot.slane %v1126, 2
        %v1175 = vrot.slane %v1127, 2
        %v1176 = vsel %vm605, %v1174, %v1175
        %v1177 = vrot.slane %v1128, 2
        %v1178 = vsel %vm605, %v1175, %v1177
        %v1179 = vrot.slane %v1129, 2
        %v1180 = vrot.slane %v1130, 2
        %v1181 = vsel %vm605, %v1179, %v1180
        %v1182 = vrot.slane %v1131, 2
        %v1183 = vsel %vm605, %v1180, %v1182
        %v1184 = vrot.slane %v1132, 2
        %v1185 = vrot.slane %v1133, 2
        %v1186 = vsel %vm605, %v1184, %v1185
        %v1187 = vrot.slane %v1134, 2
        %v1188 = vsel %vm605, %v1185, %v1187
        %v1189 = vrot.slane %v1135, 2
        %v1190 = vrot.slane %v1136, 2
        %v1191 = vsel %vm605, %v1189, %v1190
        %v1192 = vrot.slane %v1137, 2
        %v1193 = vsel %vm605, %v1190, %v1192
        %v1194 = vrot.slane %v1138, 2
        %v1195 = vrot.slane %v1139, 2
        %v1196 = vsel %vm605, %v1194, %v1195
        %v1197 = vrot.slane %v1140, 2
        %v1198 = vsel %vm605, %v1195, %v1197
        %v1199 = vrot.slane %v1141, 2
        %v1200 = vrot.slane %v1142, 2
        %v1201 = vsel %vm605, %v1199, %v1200
        %v1202 = vrot.slane %v1143, 2
        %v1203 = vsel %vm605, %v1200, %v1202
        %v1204 = vrot.slane %v1144, 2
        %v1205 = vrot.slane %v1145, 2
        %v1206 = vsel %vm605, %v1204, %v1205
        %v1207 = vrot.slane %v1146, 2
        %v1208 = vsel %vm605, %v1205, %v1207
        %v1209 = vrot.slane %v1147, 2
        %v1210 = vrot.slane %v1148, 2
        %v1211 = vsel %vm605, %v1209, %v1210
        %v1212 = vrot.slane %v1149, 2
        %v1213 = vsel %vm605, %v1210, %v1212
        %v1230 = vadd.f32 %v1106, %v1176
        %v1231 = vadd.f32 %v1107, %v1178
        %v1232 = vadd.f32 %v1108, %v1181
        %v1233 = vadd.f32 %v1109, %v1183
        %v1234 = vadd.f32 %v1110, %v1186
        %v1235 = vadd.f32 %v1111, %v1188
        %v1236 = vadd.f32 %v1112, %v1191
        %v1237 = vadd.f32 %v1113, %v1193
        %v1238 = vadd.f32 %v1114, %v1196
        %v1239 = vadd.f32 %v1115, %v1198
        %v1240 = vadd.f32 %v1116, %v1201
        %v1241 = vadd.f32 %v1117, %v1203
        %v1242 = vadd.f32 %v1118, %v1206
        %v1243 = vadd.f32 %v1119, %v1208
        %v1244 = vadd.f32 %v1120, %v1211
        %v1245 = vadd.f32 %v1121, %v1213
        %v1246 = vld [vmem:[%s2] sm:$0xf]
        %vm1247 = vcmask 31744
        %v1249 = vsel %vm1247, %v1230, 0
        %v1252 = vsel %vm1247, %v1231, 0
        %v1255 = vsel %vm1247, %v1232, 0
        %v1258 = vsel %vm1247, %v1233, 0
        %v1261 = vsel %vm1247, %v1234, 0
        %v1264 = vsel %vm1247, %v1235, 0
        %v1267 = vsel %vm1247, %v1236, 0
        %v1270 = vsel %vm1247, %v1237, 0
        %v1273 = vsel %vm1247, %v1238, 0
        %v1276 = vsel %vm1247, %v1239, 0
        %v1279 = vsel %vm1247, %v1240, 0
        %v1282 = vsel %vm1247, %v1241, 0
        %v1285 = vsel %vm1247, %v1242, 0
        %v1288 = vsel %vm1247, %v1243, 0
        %v1291 = vsel %vm1247, %v1244, 0
        %v1294 = vsel %vm1247, %v1245, 0
        %vm1296 = vcmask 1043456
        %v1298 = vsel %vm1296, %v1246, 0
        %1300 = vmatprep.subr.mxu0 0.0
        %1301 = vmatpush1.msra.mxu0 %v1298
        %1302 = vmatprep.subr.mxu0 0.0
        %1303 = vmatpush1.msra.mxu0 0.0
        %1304 = vmatprep.subr.mxu0 0.0
        %1305 = vmatpush1.msra.mxu0 0.0
        %1306 = vmatprep.subr.mxu0 0.0
        %1307 = vmatpush1.msra.mxu0 0.0
        %1308 = vmatprep.subr.mxu0 0.0
        %1309 = vmatpush1.msra.mxu0 0.0
        %1310 = vmatprep.subr.mxu0 0.0
        %1311 = vmatpush1.msra.mxu0 0.0
        %1312 = vmatprep.subr.mxu0 0.0
        %1313 = vmatpush1.msra.mxu0 0.0
        %1314 = vmatprep.subr.mxu0 0.0
        %1315 = vmatpush1.msra.mxu0 0.0
        %1316 = vmatprep.subr.mxu0 0.0
        %1317 = vmatpush1.msra.mxu0 0.0
        %1318 = vmatprep.subr.mxu0 0.0
        %1319 = vmatpush1.msra.mxu0 0.0
        %1320 = vmatprep.subr.mxu0 0.0
        %1321 = vmatpush1.msra.mxu0 0.0
        %1322 = vmatprep.subr.mxu0 0.0
        %1323 = vmatpush1.msra.mxu0 0.0
        %1324 = vmatprep.subr.mxu0 0.0
        %1325 = vmatpush1.msra.mxu0 0.0
        %1326 = vmatprep.subr.mxu0 0.0
        %1327 = vmatpush1.msra.mxu0 0.0
        %1328 = vmatprep.subr.mxu0 0.0
        %1329 = vmatpush1.msra.mxu0 0.0
        %1330 = vmatprep.subr.mxu0 0.0
        %1331 = vmatpush1.msra.mxu0 0.0
        %1332 = vmatprep.subr.mxu0 0.0
        %1333 = vmatpush1.msra.mxu0 0.0
        %1334 = vmatprep.subr.mxu0 0.0
        %1335 = vmatpush1.msra.mxu0 0.0
        %1336 = vmatprep.subr.mxu0 0.0
        %1337 = vmatpush1.msra.mxu0 0.0
        %1338 = vmatprep.subr.mxu0 0.0
        %1339 = vmatpush1.msra.mxu0 0.0
        %1340 = vmatprep.subr.mxu0 0.0
        %1341 = vmatpush1.msra.mxu0 0.0
        %1342 = vmatprep.subr.mxu0 0.0
        %1343 = vmatpush1.msra.mxu0 0.0
        %1344 = vmatprep.subr.mxu0 0.0
        %1345 = vmatpush1.msra.mxu0 0.0
        %1346 = vmatprep.subr.mxu0 0.0
        %1347 = vmatpush1.msra.mxu0 0.0
        %1348 = vmatprep.subr.mxu0 0.0
        %1349 = vmatpush1.msra.mxu0 0.0
        %1350 = vmatprep.subr.mxu0 0.0
        %1351 = vmatpush1.msra.mxu0 0.0
        %1352 = vmatprep.subr.mxu0 0.0
        %1353 = vmatpush1.msra.mxu0 0.0
        %1354 = vmatprep.subr.mxu0 0.0
        %1355 = vmatpush1.msra.mxu0 0.0
        %1356 = vmatprep.subr.mxu0 0.0
        %1357 = vmatpush1.msra.mxu0 0.0
        %1358 = vmatprep.subr.mxu0 0.0
        %1359 = vmatpush1.msra.mxu0 0.0
        %1360 = vmatprep.subr.mxu0 0.0
        %1361 = vmatpush1.msra.mxu0 0.0
        %1362 = vmatprep.subr.mxu0 0.0
        %1363 = vmatpush1.msra.mxu0 0.0
        %1364 = vmatprep.mubr.f32.mxu0 0.0
        %1365 = vmatmul.mubr.f32.gmra.mrb[0].mxu0 %v1249
        %v1366 = vpop.f32.mrb[0].mxu0
        %v1367 = vadd.f32 0.0, %v1366
        %v1368 = vpop.f32.mrb[0].mxu0
        %1369 = vmatprep.mubr.f32.mxu0 0.0
        %1370 = vmatmul.mubr.f32.gmra.mrb[0].mxu0 %v1252
        %v1371 = vpop.f32.mrb[0].mxu0
        %v1372 = vadd.f32 0.0, %v1371
        %v1373 = vpop.f32.mrb[0].mxu0
        %1374 = vmatprep.mubr.f32.mxu0 0.0
        %1375 = vmatmul.mubr.f32.gmra.mrb[0].mxu0 %v1255
        %v1376 = vpop.f32.mrb[0].mxu0
        %v1377 = vadd.f32 0.0, %v1376
        %v1378 = vpop.f32.mrb[0].mxu0
        %1379 = vmatprep.mubr.f32.mxu0 0.0
        %1380 = vmatmul.mubr.f32.gmra.mrb[0].mxu0 %v1258
        %v1381 = vpop.f32.mrb[0].mxu0
        %v1382 = vadd.f32 0.0, %v1381
        %v1383 = vpop.f32.mrb[0].mxu0
        %1384 = vmatprep.mubr.f32.mxu0 0.0
        %1385 = vmatmul.mubr.f32.gmra.mrb[0].mxu0 %v1261
        %v1386 = vpop.f32.mrb[0].mxu0
        %v1387 = vadd.f32 0.0, %v1386
        %v1388 = vpop.f32.mrb[0].mxu0
        %1389 = vmatprep.mubr.f32.mxu0 0.0
        %1390 = vmatmul.mubr.f32.gmra.mrb[0].mxu0 %v1264
        %v1391 = vpop.f32.mrb[0].mxu0
        %v1392 = vadd.f32 0.0, %v1391
        %v1393 = vpop.f32.mrb[0].mxu0
        %1394 = vmatprep.mubr.f32.mxu0 0.0
        %1395 = vmatmul.mubr.f32.gmra.mrb[0].mxu0 %v1267
        %v1396 = vpop.f32.mrb[0].mxu0
        %v1397 = vadd.f32 0.0, %v1396
        %v1398 = vpop.f32.mrb[0].mxu0
        %1399 = vmatprep.mubr.f32.mxu0 0.0
        %1400 = vmatmul.mubr.f32.gmra.mrb[0].mxu0 %v1270
        %v1401 = vpop.f32.mrb[0].mxu0
        %v1402 = vadd.f32 0.0, %v1401
        %v1403 = vpop.f32.mrb[0].mxu0
        %1404 = vmatprep.mubr.f32.mxu0 0.0
        %1405 = vmatmul.mubr.f32.gmra.mrb[0].mxu0 %v1273
        %v1406 = vpop.f32.mrb[0].mxu0
        %v1407 = vadd.f32 0.0, %v1406
        %v1408 = vpop.f32.mrb[0].mxu0
        %1409 = vmatprep.mubr.f32.mxu0 0.0
        %1410 = vmatmul.mubr.f32.gmra.mrb[0].mxu0 %v1276
        %v1411 = vpop.f32.mrb[0].mxu0
        %v1412 = vadd.f32 0.0, %v1411
        %v1413 = vpop.f32.mrb[0].mxu0
        %1414 = vmatprep.mubr.f32.mxu0 0.0
        %1415 = vmatmul.mubr.f32.gmra.mrb[0].mxu0 %v1279
        %v1416 = vpop.f32.mrb[0].mxu0
        %v1417 = vadd.f32 0.0, %v1416
        %v1418 = vpop.f32.mrb[0].mxu0
        %1419 = vmatprep.mubr.f32.mxu0 0.0
        %1420 = vmatmul.mubr.f32.gmra.mrb[0].mxu0 %v1282
        %v1421 = vpop.f32.mrb[0].mxu0
        %v1422 = vadd.f32 0.0, %v1421
        %v1423 = vpop.f32.mrb[0].mxu0
        %1424 = vmatprep.mubr.f32.mxu0 0.0
        %1425 = vmatmul.mubr.f32.gmra.mrb[0].mxu0 %v1285
        %v1426 = vpop.f32.mrb[0].mxu0
        %v1427 = vadd.f32 0.0, %v1426
        %v1428 = vpop.f32.mrb[0].mxu0
        %1429 = vmatprep.mubr.f32.mxu0 0.0
        %1430 = vmatmul.mubr.f32.gmra.mrb[0].mxu0 %v1288
        %v1431 = vpop.f32.mrb[0].mxu0
        %v1432 = vadd.f32 0.0, %v1431
        %v1433 = vpop.f32.mrb[0].mxu0
        %1434 = vmatprep.mubr.f32.mxu0 0.0
        %1435 = vmatmul.mubr.f32.gmra.mrb[0].mxu0 %v1291
        %v1436 = vpop.f32.mrb[0].mxu0
        %v1437 = vadd.f32 0.0, %v1436
        %v1438 = vpop.f32.mrb[0].mxu0
        %1439 = vmatprep.mubr.f32.mxu0 0.0
        %1440 = vmatmul.mubr.f32.gmra.mrb[0].mxu0 %v1294
        %v1441 = vpop.f32.mrb[0].mxu0
        %v1442 = vadd.f32 0.0, %v1441
        %v1443 = vpop.f32.mrb[0].mxu0
        %1444 = vdwg.mxu0
        %1445 = vxpose.xlu0.b32.start [1/16] %v1367, 128
        %1446 = vxpose.xlu0.b32.cont [2/16] %v1372, 128
        %1447 = vxpose.xlu0.b32.cont [3/16] %v1377, 128
        %1448 = vxpose.xlu0.b32.cont [4/16] %v1382, 128
        %1449 = vxpose.xlu0.b32.cont [5/16] %v1387, 128
        %1450 = vxpose.xlu0.b32.cont [6/16] %v1392, 128
        %1451 = vxpose.xlu0.b32.cont [7/16] %v1397, 128
        %1452 = vxpose.xlu0.b32.cont [8/16] %v1402, 128
        %1453 = vxpose.xlu0.b32.cont [9/16] %v1407, 128
        %1454 = vxpose.xlu0.b32.cont [10/16] %v1412, 128
        %1455 = vxpose.xlu0.b32.cont [11/16] %v1417, 128
        %1456 = vxpose.xlu0.b32.cont [12/16] %v1422, 128
        %1457 = vxpose.xlu0.b32.cont [13/16] %v1427, 128
        %1458 = vxpose.xlu0.b32.cont [14/16] %v1432, 128
        %1459 = vxpose.xlu0.b32.cont [15/16] %v1437, 128
        %1460 = vxpose.xlu0.b32.end [16/16] %v1442, 128
        %v1461 = vpop.trf.xlu0
        %v1462 = vpop.trf.xlu0
        %v1463 = vpop.trf.xlu0
        %v1464 = vpop.trf.xlu0
        %v1465 = vpop.trf.xlu0
        %v1466 = vpop.trf.xlu0
        %v1467 = vpop.trf.xlu0
        %v1468 = vpop.trf.xlu0
        %v1469 = vpop.trf.xlu0
        %v1470 = vpop.trf.xlu0
        %v1471 = vpop.trf.xlu0
        %v1472 = vpop.trf.xlu0
        %v1473 = vpop.trf.xlu0
        %v1474 = vpop.trf.xlu0
        %v1475 = vpop.trf.xlu0
        %v1476 = vpop.trf.xlu0
        %1477 = vadd.xlane.f32.xlu0 %v1461
        %v1478 = vpop.xlane.xlu0 %1477
        %vm1479 = vcmask 7168
        %1480 = vst.msk [vmem:[%s230] sm:$0xff] %vm1479, %v1478
        %v1481 = vmul.f32 %v1461, %v1461
        %1482 = vadd.xlane.f32.xlu0 %v1481
        %v1483 = vpop.xlane.xlu0 %1482
        %vm1484 = vcmask 15368
        %1485 = vst.msk [vmem:[%s230] sm:$0xff] %vm1484, %v1483
        %1486 = vst [vmem:[%s207] sm:$0xff] %v1461
        %s1487 = sand.u32 %s109, 1
        %s1488 = scalar_lea.sflag [#allocation4], %s1487
        %s1489 = sand.u32 %s109, 1
        %s1490 = smul.addr %s1489, 8
        %s1491 = scalar_lea.vmem [#allocation3], %s1490
        %p1492 = scmp.lt.s32.totalorder %s23, 1
        %s1493 = scalar_select %p1492, %s23, 1
        %p1494 = scmp.lt.s32.totalorder %s24, 1
        %s1495 = scalar_select %p1494, %s24, 1
        %s1496 = smul.addr %s1493, 2
        %s1497 = sadd.s32 %s1495, %s1496
        %s1498 = smul.addr %s1497, 8
        %s1499 = scalar_lea.vmem %s4, %s1498
        // Predicated region
        $region37: #{tpu_custom_call.1} parent=31 // pred_check
          %p1500 = pneg %p119
        $region38: #{tpu_custom_call.1} parent=31 // pred_check_branch
          %1502 = sbr.rel (%p1500) target = $region40
        $region39: #{tpu_custom_call.1} parent=31 // pred_region
          %s1504 = ssub.s32 128, 128
          %1505 = vsyncadd %s1488, %s1504
          %s1506 = smul.addr %s23, 2
          %s1507 = sadd.s32 %s24, %s1506
          %s1508 = smul.addr %s1507, 128
          %s1509 = scalar_lea.hbm %s3, %s1508
          %s1511 = sshll.u32 %s1491, 4
          %s1512 = int_to_ptr.vmem [resolvable:$true] %s1511
          %1514 = dma.vmem_to_hbm [thread:$0]  %s1512, 128, %s1509, %s1488
        $region40: #{tpu_custom_call.1} parent=31 // pred_fallthru
          _
        // Predicated region
        $region41: #{tpu_custom_call.1} parent=31 // pred_check
          %p1515 = pneg %p147
        $region42: #{tpu_custom_call.1} parent=31 // pred_check_branch
          %1517 = sbr.rel (%p1515) target = $region44
        $region43: #{tpu_custom_call.1} parent=31 // pred_region
          _
        $region44: #{tpu_custom_call.1} parent=31 // pred_fallthru
          _
      $region32: #{tpu_custom_call.1} parent=5 // pred_fallthru
        _
      %p1518 = scmp.le.s32.totalorder 2, %s14
      // Predicated region
      $region45: #{tpu_custom_call.1} parent=5 // pred_check
        %p1519 = pneg %p1518
      $region46: #{tpu_custom_call.1} parent=5 // pred_check_branch
        %1521 = sbr.rel (%p1519) target = $region48
      $region47: #{tpu_custom_call.1} parent=5 // pred_region
        %s1522 = ssub.s32 %s14, 2
        // Predicated region
        $region49: #{tpu_custom_call.1} parent=47 // pred_check
          %p1523 = pneg %p125
        $region50: #{tpu_custom_call.1} parent=47 // pred_check_branch
          %1525 = sbr.rel (%p1523) target = $region52
        $region51: #{tpu_custom_call.1} parent=47 // pred_region
          %s1526 = sand.u32 %s110, 1
          %s1527 = scalar_lea.sflag [#allocation4], %s1526
          %s1528 = sand.u32 %s110, 1
          %s1529 = smul.addr %s1528, 8
          %s1530 = scalar_lea.vmem [#allocation3], %s1529
          %1531 = dma.done %s1527, 128
        $region52: #{tpu_custom_call.1} parent=47 // pred_fallthru
          _
        // Predicated region
        $region53: #{tpu_custom_call.1} parent=47 // pred_check
          %p1532 = pneg %p153
        $region54: #{tpu_custom_call.1} parent=47 // pred_check_branch
          %1534 = sbr.rel (%p1532) target = $region56
        $region55: #{tpu_custom_call.1} parent=47 // pred_region
          %p1535 = scmp.lt.s32.totalorder %s25, 1
          %s1536 = scalar_select %p1535, %s25, 1
          %p1537 = scmp.lt.s32.totalorder %s26, 1
          %s1538 = scalar_select %p1537, %s26, 1
          %s1539 = smul.addr %s1536, 2
          %s1540 = sadd.s32 %s1538, %s1539
          %s1541 = smul.addr %s1540, 8
          %s1542 = scalar_lea.vmem %s4, %s1541
        $region56: #{tpu_custom_call.1} parent=47 // pred_fallthru
          _
      $region48: #{tpu_custom_call.1} parent=5 // pred_fallthru
        _
    $region6: #{tpu_custom_call.1} parent=1 // loop_footer
      %s18 = sadd.s32 1, %s14
    $region7: #{tpu_custom_call.1} parent=1 // loop_footer_branch
      %13 = sbr.rel target = $region3
    $region8: #{tpu_custom_call.1} parent=1 // loop_exit
      _
    %1543 = vsyncpa [#allocation4], 1
    %s1544 = scalar_lea.sflag [#allocation4], 1
    %1545 = vsyncpa %s1544, 1

</llo_original>
